<compile_context>
chip_gen: v7x
topology: tpu7x:2x2x1
jax: 0.10.0
libtpu: 0.0.40
codegen_flags: <defaults>
</compile_context>

<pallas_src>
import jax
import jax.numpy as jnp
from jax.experimental import pallas as pl
from jax.experimental.pallas import tpu as pltpu

C_IN, C_MID, C_OUT = 3, 64, 1000
KH = KW = 3
H_IN = W_IN = 5
OH, OW = H_IN - KH + 1, W_IN - KW + 1      # 3 x 3 conv1 output
N_POS = OH * OW                            # 9 positions == conv2 receptive field
K1 = C_IN * KH * KW                        # 27  per-position patch features
K1_ALL = N_POS * K1                        # 243 lane-dense patch row
K2 = N_POS * C_MID                         # 576 conv2 contraction depth


# ----------------------------------------------------------------------------
# Fused kernel: two chained dense matmuls (bf16 operands, f32 accumulate),
# bias + ReLU epilogues in f32. Everything resident in VMEM (~1.5 MB weights).
# ----------------------------------------------------------------------------
def _fused_forward_kernel(p_ref, w1_ref, b1_ref, w2_ref, b2_ref, o_ref):
    """p_ref  : (tm, 243)   bf16  im2col patches, feature order (pos, c, kh, kw)
       w1_ref : (243, 576)  bf16  block-diagonal conv1 weight (9 x (27, 64))
       b1_ref : (1, 576)    f32   conv1 bias tiled per position
       w2_ref : (576, 1000) bf16  conv2 weight, rows ordered (pos, c_mid)
       b2_ref : (1, 1000)   f32
       o_ref  : (tm, 1000)  f32
    """
    h = jnp.dot(p_ref[...], w1_ref[...], preferred_element_type=jnp.float32)
    h = jnp.maximum(h + b1_ref[...], 0.0)                       # (tm, 576) f32
    y = jnp.dot(h.astype(jnp.bfloat16), w2_ref[...],
                preferred_element_type=jnp.float32) + b2_ref[...]
    o_ref[...] = y.astype(o_ref.dtype)


def _pick_block_m(n):
    # Tile M only when there are >= 2 full tiles (multiple of 8, divides n);
    # otherwise a single block covering the whole batch (block == full dims).
    # 2048-row cap keeps double-buffered (tm,1000) f32 + (tm,243) bf16 blocks
    # inside v7x's default scoped VMEM; on v5e/v6e a larger tile is better.
    for bm in (2048, 1024, 512, 256, 128, 64, 32, 16, 8):
        if n >= 2 * bm and n % bm == 0:
            return bm
    return n


def fused_forward(patches, w1_bd, b1_row, w2_mat, b2_row, *, block_m=None):
    n, k1_all = patches.shape
    k2 = w1_bd.shape[1]
    c_out = w2_mat.shape[1]
    if block_m is None:
        block_m = _pick_block_m(n)
    grid = (n // block_m,)
    return pl.pallas_call(
        _fused_forward_kernel,
        out_shape=jax.ShapeDtypeStruct((n, c_out), jnp.float32),
        grid=grid,
        in_specs=[
            pl.BlockSpec((block_m, k1_all), lambda i: (i, 0)),
            # Constant index_maps: weight/bias blocks are not re-fetched per step.
            pl.BlockSpec((k1_all, k2), lambda i: (0, 0)),
            pl.BlockSpec((1, k2), lambda i: (0, 0)),
            pl.BlockSpec((k2, c_out), lambda i: (0, 0)),
            pl.BlockSpec((1, c_out), lambda i: (0, 0)),
        ],
        out_specs=pl.BlockSpec((block_m, c_out), lambda i: (i, 0)),
        compiler_params=pltpu.CompilerParams(
            dimension_semantics=("parallel",)),
    )(patches, w1_bd, b1_row, w2_mat, b2_row)


# ----------------------------------------------------------------------------
# Plain-JAX glue: lane-dense im2col of the tiny 5x5 input, batch-major (N, 243).
# TODO(synk): build the patches inside the kernel from a (tm, 75) x block.
# ----------------------------------------------------------------------------
def _im2col(x):
    """x: (N, 3, 5, 5) -> (N, 243); feature order (position, c, kh, kw)."""
    n = x.shape[0]
    cols = [
        x[:, :, oi:oi + KH, oj:oj + KW].reshape(n, K1)
        for oi in range(OH) for oj in range(OW)
    ]
    return jnp.concatenate(cols, axis=1)


def super_resolution_net(x, params):
    """x: (N, 3, 5, 5) float32 NCHW -> (N, 1000) float32."""
    patches = _im2col(x).astype(jnp.bfloat16)
    return fused_forward(patches, params["w1_bd"], params["b1"],
                         params["w2_mat"], params["b2"])


# ----------------------------------------------------------------------------
# One-time parameter preparation (hoisted out of the per-call forward).
# ----------------------------------------------------------------------------
def prepare_params(w1, b1, w2, b2):
    """w1: (64,3,3,3) OIHW, b1: (64,), w2: (1000,64,3,3) OIHW, b2: (1000,)."""
    # conv1 as a matmul: rows ordered (c_in, kh, kw) to match the im2col patches.
    w1_mat = w1.reshape(C_MID, K1).T.astype(jnp.float32)            # (27, 64)
    # Fold the 9 output positions into one block-diagonal weight: position p's
    # patch features (rows p*27..) map to position p's channels (cols p*64..).
    w1_bd = jnp.kron(jnp.eye(N_POS, dtype=jnp.float32), w1_mat)     # (243, 576)
    b1_row = jnp.tile(b1.astype(jnp.float32), N_POS).reshape(1, K2)  # (1, 576)
    # conv2 output is 1x1 spatial: contraction over (kh, kw, c_mid) == h's
    # (position, channel) feature order.
    w2_mat = jnp.transpose(w2, (2, 3, 1, 0)).reshape(K2, C_OUT)      # (576, 1000)
    b2_row = b2.reshape(1, C_OUT).astype(jnp.float32)
    return {
        "w1_bd": w1_bd.astype(jnp.bfloat16),      # ~0.27 MB
        "b1": b1_row,
        "w2_mat": w2_mat.astype(jnp.bfloat16),    # ~1.15 MB (dominant HBM traffic)
        "b2": b2_row,
    }


def init_raw_params(key):
    k1, k2, k3, k4 = jax.random.split(key, 4)
    fan1, fan2 = C_IN * KH * KW, C_MID * KH * KW
    return (
        jax.random.normal(k1, (C_MID, C_IN, KH, KW), jnp.float32) / jnp.sqrt(fan1),
        jax.random.normal(k2, (C_MID,), jnp.float32) * 0.01,
        jax.random.normal(k3, (C_OUT, C_MID, KH, KW), jnp.float32) / jnp.sqrt(fan2),
        jax.random.normal(k4, (C_OUT,), jnp.float32) * 0.01,
    )


if __name__ == "__main__":
    key = jax.random.PRNGKey(0)
    kx, kp = jax.random.split(key)

    batch = 2
    x = jax.random.normal(kx, (batch, C_IN, H_IN, W_IN), jnp.float32)
    w1, b1, w2, b2 = init_raw_params(kp)
    params = prepare_params(w1, b1, w2, b2)     # one-time prep, not in hot path

    fwd = jax.jit(super_resolution_net)
    out = jax.block_until_ready(fwd(x, params))
    assert out.shape == (batch, C_OUT), out.shape

    # Cross-check vs. pure-JAX f32 reference (kernel uses bf16 operands for
    # both matmuls with f32 accumulation, so tolerance is relaxed accordingly).
    ref1 = jax.lax.conv_general_dilated(
        x, w1, (1, 1), "VALID",
        dimension_numbers=("NCHW", "OIHW", "NCHW")) + b1[None, :, None, None]
    ref1 = jnp.maximum(ref1, 0.0)
    ref2 = jax.lax.conv_general_dilated(
        ref1, w2, (1, 1), "VALID",
        dimension_numbers=("NCHW", "OIHW", "NCHW")) + b2[None, :, None, None]
    ref = ref2.reshape(-1, C_OUT)
    assert jnp.allclose(out, ref, atol=5e-2, rtol=5e-2), (
        float(jnp.max(jnp.abs(out - ref))))

    print("KERNEL_OK")
</pallas_src>

<mosaic_0001>
module attributes {stable_mosaic.version = 11 : i64} {
  func.func @_fused_forward_kernel(%arg0: i32, %arg1: memref<2x243xbf16, #tpu.memory_space<vmem>>, %arg2: memref<243x576xbf16, #tpu.memory_space<vmem>>, %arg3: memref<1x576xf32, #tpu.memory_space<vmem>>, %arg4: memref<576x1000xbf16, #tpu.memory_space<vmem>>, %arg5: memref<1x1000xf32, #tpu.memory_space<vmem>>, %arg6: memref<2x1000xf32, #tpu.memory_space<vmem>>) attributes {dimension_semantics = [#tpu.dimension_semantics<parallel>], iteration_bounds = array<i64: 1>, scalar_prefetch = 0 : i64, scratch_operands = 0 : i64, tpu.core_type = #tpu.core_type<tc>, window_params = [{transform_indices = @transform_0, window_bounds = array<i64: 2, 243>}, {pipeline_mode = #tpu.pipeline_mode<synchronous>, transform_indices = @transform_1, window_bounds = array<i64: 243, 576>}, {pipeline_mode = #tpu.pipeline_mode<synchronous>, transform_indices = @transform_2, window_bounds = array<i64: 1, 576>}, {pipeline_mode = #tpu.pipeline_mode<synchronous>, transform_indices = @transform_3, window_bounds = array<i64: 576, 1000>}, {pipeline_mode = #tpu.pipeline_mode<synchronous>, transform_indices = @transform_4, window_bounds = array<i64: 1, 1000>}, {transform_indices = @transform_5, window_bounds = array<i64: 2, 1000>}]} {
    %c0 = arith.constant 0 : index
    %c0_0 = arith.constant 0 : index
    %0 = vector.load %arg1[%c0, %c0_0] : memref<2x243xbf16, #tpu.memory_space<vmem>>, vector<2x243xbf16>
    %c0_1 = arith.constant 0 : index
    %c0_2 = arith.constant 0 : index
    %1 = vector.load %arg2[%c0_1, %c0_2] : memref<243x576xbf16, #tpu.memory_space<vmem>>, vector<243x576xbf16>
    %cst = arith.constant dense<0.000000e+00> : vector<2x576xf32>
    %2 = tpu.matmul %0, %1, %cst {dimension_numbers = #tpu.dot_dimension_numbers<[1], [0], [0], [1], [0, 0, 1, 1], [], []>} : vector<2x243xbf16>, vector<243x576xbf16>, vector<2x576xf32> -> vector<2x576xf32>
    %c0_3 = arith.constant 0 : index
    %c0_4 = arith.constant 0 : index
    %3 = vector.load %arg3[%c0_3, %c0_4] : memref<1x576xf32, #tpu.memory_space<vmem>>, vector<1x576xf32>
    %4 = vector.broadcast %3 : vector<1x576xf32> to vector<2x576xf32>
    %5 = arith.addf %2, %4 : vector<2x576xf32>
    %cst_5 = arith.constant 0.000000e+00 : f32
    %6 = vector.broadcast %cst_5 : f32 to vector<2x576xf32>
    %7 = arith.maximumf %5, %6 : vector<2x576xf32>
    %8 = arith.truncf %7 : vector<2x576xf32> to vector<2x576xbf16>
    %c0_6 = arith.constant 0 : index
    %c0_7 = arith.constant 0 : index
    %9 = vector.load %arg4[%c0_6, %c0_7] : memref<576x1000xbf16, #tpu.memory_space<vmem>>, vector<576x1000xbf16>
    %cst_8 = arith.constant dense<0.000000e+00> : vector<2x1000xf32>
    %10 = tpu.matmul %8, %9, %cst_8 {dimension_numbers = #tpu.dot_dimension_numbers<[1], [0], [0], [1], [0, 0, 1, 1], [], []>} : vector<2x576xbf16>, vector<576x1000xbf16>, vector<2x1000xf32> -> vector<2x1000xf32>
    %c0_9 = arith.constant 0 : index
    %c0_10 = arith.constant 0 : index
    %11 = vector.load %arg5[%c0_9, %c0_10] : memref<1x1000xf32, #tpu.memory_space<vmem>>, vector<1x1000xf32>
    %12 = vector.broadcast %11 : vector<1x1000xf32> to vector<2x1000xf32>
    %13 = arith.addf %10, %12 : vector<2x1000xf32>
    %c0_11 = arith.constant 0 : index
    %c0_12 = arith.constant 0 : index
    %14 = vector.load %arg6[%c0_11, %c0_12] : memref<2x1000xf32, #tpu.memory_space<vmem>>, vector<2x1000xf32>
    tpu.vector_store %arg6[%c0_11, %c0_12], %13 {strides = array<i32>} : memref<2x1000xf32, #tpu.memory_space<vmem>>, vector<2x1000xf32>,
    return
  }
  func.func @transform_0(%arg0: i32) -> (i32, i32) {
    %c0_i32 = arith.constant 0 : i32
    %c0_i32_0 = arith.constant 0 : i32
    return %arg0, %c0_i32 : i32, i32
  }
  func.func @transform_1(%arg0: i32) -> (i32, i32) {
    %c0_i32 = arith.constant 0 : i32
    %c0_i32_0 = arith.constant 0 : i32
    %c0_i32_1 = arith.constant 0 : i32
    return %c0_i32, %c0_i32_0 : i32, i32
  }
  func.func @transform_2(%arg0: i32) -> (i32, i32) {
    %c0_i32 = arith.constant 0 : i32
    %c0_i32_0 = arith.constant 0 : i32
    %c0_i32_1 = arith.constant 0 : i32
    return %c0_i32, %c0_i32_0 : i32, i32
  }
  func.func @transform_3(%arg0: i32) -> (i32, i32) {
    %c0_i32 = arith.constant 0 : i32
    %c0_i32_0 = arith.constant 0 : i32
    %c0_i32_1 = arith.constant 0 : i32
    return %c0_i32, %c0_i32_0 : i32, i32
  }
  func.func @transform_4(%arg0: i32) -> (i32, i32) {
    %c0_i32 = arith.constant 0 : i32
    %c0_i32_0 = arith.constant 0 : i32
    %c0_i32_1 = arith.constant 0 : i32
    return %c0_i32, %c0_i32_0 : i32, i32
  }
  func.func @transform_5(%arg0: i32) -> (i32, i32) {
    %c0_i32 = arith.constant 0 : i32
    %c0_i32_0 = arith.constant 0 : i32
    return %arg0, %c0_i32 : i32, i32
  }
}

</mosaic_0001>

<llo_original>
// kernel: super_resolution_net.1
$region0: #{super_resolution_net.1}
  #allocation0 [shape = 'u32[]', space=smem, size = 0x4, offset = 0x4, fixed_abs, tag = 'smem constant byte address 0x4 - core index']
  #allocation1 [shape = 'u32[144,128]{1,0:T(1,128)}', space=vmem, size = 0x12000, scoped, tag = 'internal scratch']
  %s0 = inlined_call_operand.vmem [shape: bf16[2,243], index: 0, kind: input, shape index: {}]
  %s1 = inlined_call_operand.vmem [shape: bf16[243,576], index: 1, kind: input, shape index: {}]
  %s2 = inlined_call_operand.hbm [shape: f32[1,576], index: 2, kind: input, shape index: {}]
  %s3 = inlined_call_operand.hbm [shape: bf16[576,1000], index: 3, kind: input, shape index: {}]
  %s4 = inlined_call_operand.hbm [shape: f32[1,1000], index: 4, kind: input, shape index: {}]
  %s5 = inlined_call_operand.hbm [shape: f32[2,1000], index: 5, kind: output, shape index: {}]
  %s6 = sld [smem:[#allocation0]]
  $region42: #{super_resolution_net.1} parent=0
    _
  %s8 = ssub.s32 1, %s6
  %s9 = scalar_select 0, %s8, %s6
  $region1: #{super_resolution_net.1} parent=0
    #allocation2 [shape = 'u8[2560]{0}', space=vmem, size = 0xc00, scoped, tag = 'input window, operand 2, single buffered']
    #allocation3 [shape = 's32[1]{0}', space=sflag, size = 0x4, scoped, tag = 'scoped memory for super_resolution_net.1']
    #allocation4 [shape = 's32[1]{0}', space=sflag, size = 0x4, scoped, tag = 'scoped memory for super_resolution_net.1']
    #allocation5 [shape = 'u8[1179648]{0}', space=vmem, size = 0x120000, scoped, tag = 'input window, operand 3, single buffered']
    #allocation6 [shape = 's32[1]{0}', space=sflag, size = 0x4, scoped, tag = 'scoped memory for super_resolution_net.1']
    #allocation7 [shape = 'u8[4096]{0}', space=vmem, size = 0x1000, scoped, tag = 'input window, operand 4, single buffered']
    #allocation8 [shape = 'u8[8192]{0}', space=vmem, size = 0x2000, scoped, tag = 'output window, operand 0, single buffered']
    %10 = vsyncpa [#allocation3], 0
    %11 = vsyncpa [#allocation6], 0
    %12 = vsyncpa [#allocation4], 0
    // Predicated region
    $region2: #{super_resolution_net.1} parent=1 // pred_check
      _
    $region3: #{super_resolution_net.1} parent=1 // pred_check_branch
      %14 = sbr.rel (0) target = $region5
    $region4: #{super_resolution_net.1} parent=1 // pred_region
      _
    $region5: #{super_resolution_net.1} parent=1 // pred_fallthru
      _
    // Predicated region
    $region6: #{super_resolution_net.1} parent=1 // pred_check
      _
    $region7: #{super_resolution_net.1} parent=1 // pred_check_branch
      %16 = sbr.rel (0) target = $region9
    $region8: #{super_resolution_net.1} parent=1 // pred_region
      _
    $region9: #{super_resolution_net.1} parent=1 // pred_fallthru
      _
    // Predicated region
    $region10: #{super_resolution_net.1} parent=1 // pred_check
      _
    $region11: #{super_resolution_net.1} parent=1 // pred_check_branch
      %18 = sbr.rel (0) target = $region13
    $region12: #{super_resolution_net.1} parent=1 // pred_region
      %s20 = ssub.s32 80, 80
      %21 = vsyncadd [#allocation3], %s20
      %s23 = sshll.u32 [#allocation2], 4
      %s24 = int_to_ptr.vmem [resolvable:$true] %s23
      %26 = dma.hbm_to_vmem [thread:$0]  %s2, 80, %s24, [#allocation3]
    $region13: #{super_resolution_net.1} parent=1 // pred_fallthru
      _
    // Predicated region
    $region14: #{super_resolution_net.1} parent=1 // pred_check
      _
    $region15: #{super_resolution_net.1} parent=1 // pred_check_branch
      %28 = sbr.rel (0) target = $region17
    $region16: #{super_resolution_net.1} parent=1 // pred_region
      %s30 = ssub.s32 36864, 36864
      %31 = vsyncadd [#allocation6], %s30
      %s32 = sshll.u32 [#allocation5], 4
      %s33 = int_to_ptr.vmem [resolvable:$true] %s32
      %38 = dma.hbm_to_vmem [thread:$0]  %s3, 36864, %s33, [#allocation6], 512, 512, 32
    $region17: #{super_resolution_net.1} parent=1 // pred_fallthru
      _
    // Predicated region
    $region18: #{super_resolution_net.1} parent=1 // pred_check
      _
    $region19: #{super_resolution_net.1} parent=1 // pred_check_branch
      %40 = sbr.rel (0) target = $region21
    $region20: #{super_resolution_net.1} parent=1 // pred_region
      %s42 = ssub.s32 128, 128
      %43 = vsyncadd [#allocation6], %s42
      %s45 = sshll.u32 [#allocation7], 4
      %s46 = int_to_ptr.vmem [resolvable:$true] %s45
      %48 = dma.hbm_to_vmem [thread:$0]  %s4, 128, %s46, [#allocation6]
    $region21: #{super_resolution_net.1} parent=1 // pred_fallthru
      _
    // Predicated region
    $region22: #{super_resolution_net.1} parent=1 // pred_check
      _
    $region23: #{super_resolution_net.1} parent=1 // pred_check_branch
      %50 = sbr.rel (0) target = $region25
    $region24: #{super_resolution_net.1} parent=1 // pred_region
      %51 = dma.done [#allocation3], 80
    $region25: #{super_resolution_net.1} parent=1 // pred_fallthru
      _
    // Predicated region
    $region26: #{super_resolution_net.1} parent=1 // pred_check
      _
    $region27: #{super_resolution_net.1} parent=1 // pred_check_branch
      %53 = sbr.rel (0) target = $region29
    $region28: #{super_resolution_net.1} parent=1 // pred_region
      %54 = dma.done [#allocation6], 36864
    $region29: #{super_resolution_net.1} parent=1 // pred_fallthru
      _
    // Predicated region
    $region30: #{super_resolution_net.1} parent=1 // pred_check
      _
    $region31: #{super_resolution_net.1} parent=1 // pred_check_branch
      %56 = sbr.rel (0) target = $region33
    $region32: #{super_resolution_net.1} parent=1 // pred_region
      %57 = dma.done [#allocation6], 128
    $region33: #{super_resolution_net.1} parent=1 // pred_fallthru
      _
    %v59 = vld [vmem:[%s0] sm:$0x3]
    %v60 = vld [vmem:[%s1] sm:$0xff]
    %v61 = vld [vmem:[%s1 + $0x8] sm:$0xff]
    %v62 = vld [vmem:[%s1 + $0x10] sm:$0xf]
    %v63 = vld [vmem:[%s1 + $0x14] sm:$0xff]
    %v64 = vld [vmem:[%s1 + $0x1c] sm:$0xff]
    %v65 = vld [vmem:[%s1 + $0x24] sm:$0xf]
    %v66 = vld [vmem:[%s1 + $0x28] sm:$0xff]
    %v67 = vld [vmem:[%s1 + $0x30] sm:$0xff]
    %v68 = vld [vmem:[%s1 + $0x38] sm:$0xf]
    %v69 = vld [vmem:[%s1 + $0x3c] sm:$0xff]
    %v70 = vld [vmem:[%s1 + $0x44] sm:$0xff]
    %v71 = vld [vmem:[%s1 + $0x4c] sm:$0xf]
    %v72 = vld [vmem:[%s1 + $0x50] sm:$0xff]
    %v73 = vld [vmem:[%s1 + $0x58] sm:$0xff]
    %v74 = vld [vmem:[%s1 + $0x60] sm:$0xf]
    %v75 = vld [vmem:[%s1 + $0x64] sm:$0xff]
    %v76 = vld [vmem:[%s1 + $0x6c] sm:$0xff]
    %v77 = vld [vmem:[%s1 + $0x74] sm:$0xf]
    %v78 = vld [vmem:[%s1 + $0x78] sm:$0xff]
    %v79 = vld [vmem:[%s1 + $0x80] sm:$0xff]
    %v80 = vld [vmem:[%s1 + $0x88] sm:$0xf]
    %v81 = vld [vmem:[%s1 + $0x8c] sm:$0xff]
    %v82 = vld [vmem:[%s1 + $0x94] sm:$0xff]
    %v83 = vld [vmem:[%s1 + $0x9c] sm:$0xf]
    %v84 = vld [vmem:[%s1 + $0xa0] sm:$0xff]
    %v85 = vld [vmem:[%s1 + $0xa8] sm:$0xff]
    %v86 = vld [vmem:[%s1 + $0xb0] sm:$0xf]
    %v87 = vld [vmem:[%s1 + $0xb4] sm:$0xff]
    %v88 = vld [vmem:[%s1 + $0xbc] sm:$0xff]
    %v89 = vld [vmem:[%s1 + $0xc4] sm:$0xf]
    %v90 = vld [vmem:[%s1 + $0xc8] sm:$0xff]
    %v91 = vld [vmem:[%s1 + $0xd0] sm:$0xff]
    %v92 = vld [vmem:[%s1 + $0xd8] sm:$0xf]
    %v93 = vld [vmem:[%s1 + $0xdc] sm:$0xff]
    %v94 = vld [vmem:[%s1 + $0xe4] sm:$0xff]
    %v95 = vld [vmem:[%s1 + $0xec] sm:$0xf]
    %v96 = vld [vmem:[%s1 + $0xf0] sm:$0xff]
    %v97 = vld [vmem:[%s1 + $0xf8] sm:$0xff]
    %v98 = vld [vmem:[%s1 + $0x100] sm:$0xf]
    %v99 = vld [vmem:[%s1 + $0x104] sm:$0xff]
    %v100 = vld [vmem:[%s1 + $0x10c] sm:$0xff]
    %v101 = vld [vmem:[%s1 + $0x114] sm:$0xf]
    %v102 = vld [vmem:[%s1 + $0x118] sm:$0xff]
    %v103 = vld [vmem:[%s1 + $0x120] sm:$0xff]
    %v104 = vld [vmem:[%s1 + $0x128] sm:$0xf]
    %v105 = vld [vmem:[%s1 + $0x12c] sm:$0xff]
    %v106 = vld [vmem:[%s1 + $0x134] sm:$0xff]
    %v107 = vld [vmem:[%s1 + $0x13c] sm:$0xf]
    %v108 = vld [vmem:[%s1 + $0x140] sm:$0xff]
    %v109 = vld [vmem:[%s1 + $0x148] sm:$0xff]
    %v110 = vld [vmem:[%s1 + $0x150] sm:$0xf]
    %v111 = vld [vmem:[%s1 + $0x154] sm:$0xff]
    %v112 = vld [vmem:[%s1 + $0x15c] sm:$0xff]
    %v113 = vld [vmem:[%s1 + $0x164] sm:$0xf]
    %v114 = vld [vmem:[%s1 + $0x168] sm:$0xff]
    %v115 = vld [vmem:[%s1 + $0x170] sm:$0xff]
    %v116 = vld [vmem:[%s1 + $0x178] sm:$0xf]
    %v117 = vld [vmem:[%s1 + $0x17c] sm:$0xff]
    %v118 = vld [vmem:[%s1 + $0x184] sm:$0xff]
    %v119 = vld [vmem:[%s1 + $0x18c] sm:$0xf]
    %v120 = vld [vmem:[%s1 + $0x190] sm:$0xff]
    %v121 = vld [vmem:[%s1 + $0x198] sm:$0xff]
    %v122 = vld [vmem:[%s1 + $0x1a0] sm:$0xf]
    %v123 = vld [vmem:[%s1 + $0x1a4] sm:$0xff]
    %v124 = vld [vmem:[%s1 + $0x1ac] sm:$0xff]
    %v125 = vld [vmem:[%s1 + $0x1b4] sm:$0xf]
    %v126 = vld [vmem:[%s1 + $0x1b8] sm:$0xff]
    %v127 = vld [vmem:[%s1 + $0x1c0] sm:$0xff]
    %v128 = vld [vmem:[%s1 + $0x1c8] sm:$0xf]
    %v129 = vld [vmem:[%s1 + $0x1cc] sm:$0xff]
    %v130 = vld [vmem:[%s1 + $0x1d4] sm:$0xff]
    %v131 = vld [vmem:[%s1 + $0x1dc] sm:$0xf]
    %v132 = vld [vmem:[%s1 + $0x1e0] sm:$0xff]
    %v133 = vld [vmem:[%s1 + $0x1e8] sm:$0xff]
    %v134 = vld [vmem:[%s1 + $0x1f0] sm:$0xf]
    %v135 = vld [vmem:[%s1 + $0x1f4] sm:$0xff]
    %v136 = vld [vmem:[%s1 + $0x1fc] sm:$0xff]
    %v137 = vld [vmem:[%s1 + $0x204] sm:$0xf]
    %v138 = vld [vmem:[%s1 + $0x208] sm:$0xff]
    %v139 = vld [vmem:[%s1 + $0x210] sm:$0xff]
    %v140 = vld [vmem:[%s1 + $0x218] sm:$0xf]
    %v141 = vld [vmem:[%s1 + $0x21c] sm:$0xff]
    %v142 = vld [vmem:[%s1 + $0x224] sm:$0xff]
    %v143 = vld [vmem:[%s1 + $0x22c] sm:$0xf]
    %v144 = vld [vmem:[%s1 + $0x230] sm:$0xff]
    %v145 = vld [vmem:[%s1 + $0x238] sm:$0xff]
    %v146 = vld [vmem:[%s1 + $0x240] sm:$0xf]
    %v147 = vld [vmem:[%s1 + $0x244] sm:$0xff]
    %v148 = vld [vmem:[%s1 + $0x24c] sm:$0xff]
    %v149 = vld [vmem:[%s1 + $0x254] sm:$0xf]
    %v150 = vld [vmem:[%s1 + $0x258] sm:$0x33]
    %v151 = vld [vmem:[%s1 + $0x260] sm:$0x33]
    %v152 = vld [vmem:[%s1 + $0x268] sm:$0x3]
    %v153 = vld [vmem:[#allocation2] sm:$0x1f]
    %v155 = vlaneseq
    %v156 = vshrl.u32 %v155, 7
    %v157 = vsub.s32 0, %v156
    %v158 = vrot.slane %v153, %v157
    %v159 = vlaneseq
    %v160 = vshrl.u32 %v159, 7
    %v161 = vsub.s32 1, %v160
    %v162 = vrot.slane %v153, %v161
    %v163 = vlaneseq
    %v164 = vshrl.u32 %v163, 7
    %v165 = vsub.s32 2, %v164
    %v166 = vrot.slane %v153, %v165
    %v167 = vlaneseq
    %v168 = vshrl.u32 %v167, 7
    %v169 = vsub.s32 3, %v168
    %v170 = vrot.slane %v153, %v169
    %v171 = vlaneseq
    %v172 = vshrl.u32 %v171, 7
    %v173 = vsub.s32 4, %v172
    %v174 = vrot.slane %v153, %v173
    %v182 = vunpack.c.l.s4 1966171168
    %v183 = vunpack.c.0.s8 %v182
    %v184 = vlaneseq
    %v185 = vshrl.u32 %v184, 7
    %v186 = vsub.s32 %v183, %v185
    %v187 = vrot.slane %v59, %v186
    %v188 = vcombine.high %v187, %v187
    %v190 = vunpack.c.l.s4 1966171168
    %v191 = vunpack.c.0.s8 %v190
    %v192 = vlaneseq
    %v193 = vshrl.u32 %v192, 7
    %v194 = vsub.s32 %v191, %v193
    %v195 = vrot.slane %v187, %v194
    %v197 = vunpack.c.l.s4 1966171168
    %v198 = vunpack.c.0.s8 %v197
    %v199 = vlaneseq
    %v200 = vshrl.u32 %v199, 7
    %v201 = vsub.s32 %v198, %v200
    %v202 = vrot.slane %v188, %v201
    %v297 = vunpack.c.l.b16 %v60
    %v298 = vunpack.c.h.b16 %v60
    %v299 = vunpack.c.l.b16 %v61
    %v300 = vunpack.c.h.b16 %v61
    %v301 = vunpack.c.l.b16 %v62
    %v302 = vunpack.c.l.b16 %v63
    %v303 = vunpack.c.h.b16 %v63
    %v304 = vunpack.c.l.b16 %v64
    %v305 = vunpack.c.h.b16 %v64
    %v306 = vunpack.c.l.b16 %v65
    %v307 = vunpack.c.l.b16 %v66
    %v308 = vunpack.c.h.b16 %v66
    %v309 = vunpack.c.l.b16 %v67
    %v310 = vunpack.c.h.b16 %v67
    %v311 = vunpack.c.l.b16 %v68
    %v312 = vunpack.c.l.b16 %v69
    %v313 = vunpack.c.h.b16 %v69
    %v314 = vunpack.c.l.b16 %v70
    %v315 = vunpack.c.h.b16 %v70
    %v316 = vunpack.c.l.b16 %v71
    %v317 = vunpack.c.l.b16 %v72
    %v318 = vunpack.c.h.b16 %v72
    %v319 = vunpack.c.l.b16 %v73
    %v320 = vunpack.c.h.b16 %v73
    %v321 = vunpack.c.l.b16 %v74
    %v322 = vunpack.c.l.b16 %v75
    %v323 = vunpack.c.h.b16 %v75
    %v324 = vunpack.c.l.b16 %v76
    %v325 = vunpack.c.h.b16 %v76
    %v326 = vunpack.c.l.b16 %v77
    %v327 = vunpack.c.l.b16 %v78
    %v328 = vunpack.c.h.b16 %v78
    %v329 = vunpack.c.l.b16 %v79
    %v330 = vunpack.c.h.b16 %v79
    %v331 = vunpack.c.l.b16 %v80
    %v332 = vunpack.c.l.b16 %v81
    %v333 = vunpack.c.h.b16 %v81
    %v334 = vunpack.c.l.b16 %v82
    %v335 = vunpack.c.h.b16 %v82
    %v336 = vunpack.c.l.b16 %v83
    %v337 = vunpack.c.l.b16 %v84
    %v338 = vunpack.c.h.b16 %v84
    %v339 = vunpack.c.l.b16 %v85
    %v340 = vunpack.c.h.b16 %v85
    %v341 = vunpack.c.l.b16 %v86
    %v342 = vunpack.c.l.b16 %v87
    %v343 = vunpack.c.h.b16 %v87
    %v344 = vunpack.c.l.b16 %v88
    %v345 = vunpack.c.h.b16 %v88
    %v346 = vunpack.c.l.b16 %v89
    %v347 = vunpack.c.l.b16 %v90
    %v348 = vunpack.c.h.b16 %v90
    %v349 = vunpack.c.l.b16 %v91
    %v350 = vunpack.c.h.b16 %v91
    %v351 = vunpack.c.l.b16 %v92
    %v352 = vunpack.c.l.b16 %v93
    %v353 = vunpack.c.h.b16 %v93
    %v354 = vunpack.c.l.b16 %v94
    %v355 = vunpack.c.h.b16 %v94
    %v356 = vunpack.c.l.b16 %v95
    %v357 = vunpack.c.l.b16 %v96
    %v358 = vunpack.c.h.b16 %v96
    %v359 = vunpack.c.l.b16 %v97
    %v360 = vunpack.c.h.b16 %v97
    %v361 = vunpack.c.l.b16 %v98
    %v362 = vunpack.c.l.b16 %v99
    %v363 = vunpack.c.h.b16 %v99
    %v364 = vunpack.c.l.b16 %v100
    %v365 = vunpack.c.h.b16 %v100
    %v366 = vunpack.c.l.b16 %v101
    %v367 = vunpack.c.l.b16 %v102
    %v368 = vunpack.c.h.b16 %v102
    %v369 = vunpack.c.l.b16 %v103
    %v370 = vunpack.c.h.b16 %v103
    %v371 = vunpack.c.l.b16 %v104
    %v372 = vunpack.c.l.b16 %v105
    %v373 = vunpack.c.h.b16 %v105
    %v374 = vunpack.c.l.b16 %v106
    %v375 = vunpack.c.h.b16 %v106
    %v376 = vunpack.c.l.b16 %v107
    %v377 = vunpack.c.l.b16 %v108
    %v378 = vunpack.c.h.b16 %v108
    %v379 = vunpack.c.l.b16 %v109
    %v380 = vunpack.c.h.b16 %v109
    %v381 = vunpack.c.l.b16 %v110
    %v382 = vunpack.c.l.b16 %v111
    %v383 = vunpack.c.h.b16 %v111
    %v384 = vunpack.c.l.b16 %v112
    %v385 = vunpack.c.h.b16 %v112
    %v386 = vunpack.c.l.b16 %v113
    %v387 = vunpack.c.l.b16 %v114
    %v388 = vunpack.c.h.b16 %v114
    %v389 = vunpack.c.l.b16 %v115
    %v390 = vunpack.c.h.b16 %v115
    %v391 = vunpack.c.l.b16 %v116
    %v392 = vunpack.c.l.b16 %v117
    %v393 = vunpack.c.h.b16 %v117
    %v394 = vunpack.c.l.b16 %v118
    %v395 = vunpack.c.h.b16 %v118
    %v396 = vunpack.c.l.b16 %v119
    %v397 = vunpack.c.l.b16 %v120
    %v398 = vunpack.c.h.b16 %v120
    %v399 = vunpack.c.l.b16 %v121
    %v400 = vunpack.c.h.b16 %v121
    %v401 = vunpack.c.l.b16 %v122
    %v402 = vunpack.c.l.b16 %v123
    %v403 = vunpack.c.h.b16 %v123
    %v404 = vunpack.c.l.b16 %v124
    %v405 = vunpack.c.h.b16 %v124
    %v406 = vunpack.c.l.b16 %v125
    %v407 = vunpack.c.l.b16 %v126
    %v408 = vunpack.c.h.b16 %v126
    %v409 = vunpack.c.l.b16 %v127
    %v410 = vunpack.c.h.b16 %v127
    %v411 = vunpack.c.l.b16 %v128
    %v412 = vunpack.c.l.b16 %v129
    %v413 = vunpack.c.h.b16 %v129
    %v414 = vunpack.c.l.b16 %v130
    %v415 = vunpack.c.h.b16 %v130
    %v416 = vunpack.c.l.b16 %v131
    %v417 = vunpack.c.l.b16 %v132
    %v418 = vunpack.c.h.b16 %v132
    %v419 = vunpack.c.l.b16 %v133
    %v420 = vunpack.c.h.b16 %v133
    %v421 = vunpack.c.l.b16 %v134
    %v422 = vunpack.c.l.b16 %v135
    %v423 = vunpack.c.h.b16 %v135
    %v424 = vunpack.c.l.b16 %v136
    %v425 = vunpack.c.h.b16 %v136
    %v426 = vunpack.c.l.b16 %v137
    %v427 = vunpack.c.l.b16 %v138
    %v428 = vunpack.c.h.b16 %v138
    %v429 = vunpack.c.l.b16 %v139
    %v430 = vunpack.c.h.b16 %v139
    %v431 = vunpack.c.l.b16 %v140
    %v432 = vunpack.c.l.b16 %v141
    %v433 = vunpack.c.h.b16 %v141
    %v434 = vunpack.c.l.b16 %v142
    %v435 = vunpack.c.h.b16 %v142
    %v436 = vunpack.c.l.b16 %v143
    %v437 = vunpack.c.l.b16 %v144
    %v438 = vunpack.c.h.b16 %v144
    %v439 = vunpack.c.l.b16 %v145
    %v440 = vunpack.c.h.b16 %v145
    %v441 = vunpack.c.l.b16 %v146
    %v442 = vunpack.c.l.b16 %v147
    %v443 = vunpack.c.h.b16 %v147
    %v444 = vunpack.c.l.b16 %v148
    %v445 = vunpack.c.h.b16 %v148
    %v446 = vunpack.c.l.b16 %v149
    %v447 = vunpack.c.l.b16 %v150
    %v448 = vunpack.c.h.b16 %v150
    %v449 = vunpack.c.l.b16 %v151
    %v450 = vunpack.c.h.b16 %v151
    %v451 = vunpack.c.l.b16 %v152
    %v452 = vpack.c.b16 %v302, %v297
    %v453 = vpack.c.b16 %v303, %v298
    %v454 = vpack.c.b16 %v304, %v299
    %v455 = vpack.c.b16 %v305, %v300
    %v456 = vpack.c.b16 %v306, %v301
    %v457 = vpack.c.b16 %v312, %v307
    %v458 = vpack.c.b16 %v313, %v308
    %v459 = vpack.c.b16 %v314, %v309
    %v460 = vpack.c.b16 %v315, %v310
    %v461 = vpack.c.b16 %v316, %v311
    %v462 = vpack.c.b16 %v322, %v317
    %v463 = vpack.c.b16 %v323, %v318
    %v464 = vpack.c.b16 %v324, %v319
    %v465 = vpack.c.b16 %v325, %v320
    %v466 = vpack.c.b16 %v326, %v321
    %v467 = vpack.c.b16 %v332, %v327
    %v468 = vpack.c.b16 %v333, %v328
    %v469 = vpack.c.b16 %v334, %v329
    %v470 = vpack.c.b16 %v335, %v330
    %v471 = vpack.c.b16 %v336, %v331
    %v472 = vpack.c.b16 %v342, %v337
    %v473 = vpack.c.b16 %v343, %v338
    %v474 = vpack.c.b16 %v344, %v339
    %v475 = vpack.c.b16 %v345, %v340
    %v476 = vpack.c.b16 %v346, %v341
    %v477 = vpack.c.b16 %v352, %v347
    %v478 = vpack.c.b16 %v353, %v348
    %v479 = vpack.c.b16 %v354, %v349
    %v480 = vpack.c.b16 %v355, %v350
    %v481 = vpack.c.b16 %v356, %v351
    %v482 = vpack.c.b16 %v362, %v357
    %v483 = vpack.c.b16 %v363, %v358
    %v484 = vpack.c.b16 %v364, %v359
    %v485 = vpack.c.b16 %v365, %v360
    %v486 = vpack.c.b16 %v366, %v361
    %v487 = vpack.c.b16 %v372, %v367
    %v488 = vpack.c.b16 %v373, %v368
    %v489 = vpack.c.b16 %v374, %v369
    %v490 = vpack.c.b16 %v375, %v370
    %v491 = vpack.c.b16 %v376, %v371
    %v492 = vpack.c.b16 %v382, %v377
    %v493 = vpack.c.b16 %v383, %v378
    %v494 = vpack.c.b16 %v384, %v379
    %v495 = vpack.c.b16 %v385, %v380
    %v496 = vpack.c.b16 %v386, %v381
    %v497 = vpack.c.b16 %v392, %v387
    %v498 = vpack.c.b16 %v393, %v388
    %v499 = vpack.c.b16 %v394, %v389
    %v500 = vpack.c.b16 %v395, %v390
    %v501 = vpack.c.b16 %v396, %v391
    %v502 = vpack.c.b16 %v402, %v397
    %v503 = vpack.c.b16 %v403, %v398
    %v504 = vpack.c.b16 %v404, %v399
    %v505 = vpack.c.b16 %v405, %v400
    %v506 = vpack.c.b16 %v406, %v401
    %v507 = vpack.c.b16 %v412, %v407
    %v508 = vpack.c.b16 %v413, %v408
    %v509 = vpack.c.b16 %v414, %v409
    %v510 = vpack.c.b16 %v415, %v410
    %v511 = vpack.c.b16 %v416, %v411
    %v512 = vpack.c.b16 %v422, %v417
    %v513 = vpack.c.b16 %v423, %v418
    %v514 = vpack.c.b16 %v424, %v419
    %v515 = vpack.c.b16 %v425, %v420
    %v516 = vpack.c.b16 %v426, %v421
    %v517 = vpack.c.b16 %v432, %v427
    %v518 = vpack.c.b16 %v433, %v428
    %v519 = vpack.c.b16 %v434, %v429
    %v520 = vpack.c.b16 %v435, %v430
    %v521 = vpack.c.b16 %v436, %v431
    %v522 = vpack.c.b16 %v442, %v437
    %v523 = vpack.c.b16 %v443, %v438
    %v524 = vpack.c.b16 %v444, %v439
    %v525 = vpack.c.b16 %v445, %v440
    %v526 = vpack.c.b16 %v446, %v441
    %v527 = vpack.c.b16 %v447, %v447
    %v528 = vpack.c.b16 %v448, %v448
    %v529 = vpack.c.b16 %v449, %v449
    %v530 = vpack.c.b16 %v450, %v450
    %v531 = vpack.c.b16 %v451, %v451
    %vm607 = vcmask 941056
    %v609 = vsel %vm607, %v202, 0
    %vm611 = vcmask 1040384
    %vm612 = vcmask 1041408
    %v613 = vsel %vm611, 4294967295, 65535
    %v614 = vsel %vm612, %v613, 0
    %v616 = vand.u32 %v527, %v614
    %v619 = vand.u32 %v528, %v614
    %v622 = vand.u32 %v529, %v614
    %v625 = vand.u32 %v530, %v614
    %v628 = vand.u32 %v531, %v614
    %630 = vmatprep.subr.bf16.mxu0 %v453
    %631 = vmatpush1.bf16.msra.mxu0 %v452
    %632 = vmatprep.subr.bf16.mxu0 %v458
    %633 = vmatpush1.bf16.msra.mxu0 %v457
    %634 = vmatprep.subr.bf16.mxu0 %v463
    %635 = vmatpush1.bf16.msra.mxu0 %v462
    %636 = vmatprep.subr.bf16.mxu0 %v468
    %637 = vmatpush1.bf16.msra.mxu0 %v467
    %638 = vmatprep.subr.bf16.mxu0 %v473
    %639 = vmatpush1.bf16.msra.mxu0 %v472
    %640 = vmatprep.subr.bf16.mxu0 %v478
    %641 = vmatpush1.bf16.msra.mxu0 %v477
    %642 = vmatprep.subr.bf16.mxu0 %v483
    %643 = vmatpush1.bf16.msra.mxu0 %v482
    %644 = vmatprep.subr.bf16.mxu0 %v488
    %645 = vmatpush1.bf16.msra.mxu0 %v487
    %646 = vmatprep.subr.bf16.mxu0 %v493
    %647 = vmatpush1.bf16.msra.mxu0 %v492
    %648 = vmatprep.subr.bf16.mxu0 %v498
    %649 = vmatpush1.bf16.msra.mxu0 %v497
    %650 = vmatprep.subr.bf16.mxu0 %v503
    %651 = vmatpush1.bf16.msra.mxu0 %v502
    %652 = vmatprep.subr.bf16.mxu0 %v508
    %653 = vmatpush1.bf16.msra.mxu0 %v507
    %654 = vmatprep.subr.bf16.mxu0 %v513
    %655 = vmatpush1.bf16.msra.mxu0 %v512
    %656 = vmatprep.subr.bf16.mxu0 %v518
    %657 = vmatpush1.bf16.msra.mxu0 %v517
    %658 = vmatprep.subr.bf16.mxu0 %v523
    %659 = vmatpush1.bf16.msra.mxu0 %v522
    %660 = vmatprep.subr.bf16.mxu0 %v619
    %661 = vmatpush1.bf16.msra.mxu0 %v616
    %662 = vmatprep.mubr.bf16.mxu0 %v609
    %663 = vmatmul.mubr.bf16.gmra.mrb[0].mxu0 %v195
    %v664 = vpop.f32.mrb[0].mxu0
    %v665 = vadd.f32 %v158, %v664
    %v666 = vpop.f32.mrb[0].mxu0
    %v667 = vadd.f32 %v162, %v666
    %v668 = vpop.f32.mrb[0].mxu0
    %v669 = vpop.f32.mrb[0].mxu0
    %670 = vdwg.mxu0
    %671 = vmatprep.subr.bf16.mxu0 %v455
    %672 = vmatpush1.bf16.msra.mxu0 %v454
    %673 = vmatprep.subr.bf16.mxu0 %v460
    %674 = vmatpush1.bf16.msra.mxu0 %v459
    %675 = vmatprep.subr.bf16.mxu0 %v465
    %676 = vmatpush1.bf16.msra.mxu0 %v464
    %677 = vmatprep.subr.bf16.mxu0 %v470
    %678 = vmatpush1.bf16.msra.mxu0 %v469
    %679 = vmatprep.subr.bf16.mxu0 %v475
    %680 = vmatpush1.bf16.msra.mxu0 %v474
    %681 = vmatprep.subr.bf16.mxu0 %v480
    %682 = vmatpush1.bf16.msra.mxu0 %v479
    %683 = vmatprep.subr.bf16.mxu0 %v485
    %684 = vmatpush1.bf16.msra.mxu0 %v484
    %685 = vmatprep.subr.bf16.mxu0 %v490
    %686 = vmatpush1.bf16.msra.mxu0 %v489
    %687 = vmatprep.subr.bf16.mxu0 %v495
    %688 = vmatpush1.bf16.msra.mxu0 %v494
    %689 = vmatprep.subr.bf16.mxu0 %v500
    %690 = vmatpush1.bf16.msra.mxu0 %v499
    %691 = vmatprep.subr.bf16.mxu0 %v505
    %692 = vmatpush1.bf16.msra.mxu0 %v504
    %693 = vmatprep.subr.bf16.mxu0 %v510
    %694 = vmatpush1.bf16.msra.mxu0 %v509
    %695 = vmatprep.subr.bf16.mxu0 %v515
    %696 = vmatpush1.bf16.msra.mxu0 %v514
    %697 = vmatprep.subr.bf16.mxu0 %v520
    %698 = vmatpush1.bf16.msra.mxu0 %v519
    %699 = vmatprep.subr.bf16.mxu0 %v525
    %700 = vmatpush1.bf16.msra.mxu0 %v524
    %701 = vmatprep.subr.bf16.mxu0 %v625
    %702 = vmatpush1.bf16.msra.mxu0 %v622
    %703 = vmatprep.mubr.bf16.mxu0 %v609
    %704 = vmatmul.mubr.bf16.gmra.mrb[0].mxu0 %v195
    %v705 = vpop.f32.mrb[0].mxu0
    %v706 = vadd.f32 %v166, %v705
    %v707 = vpop.f32.mrb[0].mxu0
    %v708 = vadd.f32 %v170, %v707
    %v709 = vpop.f32.mrb[0].mxu0
    %v710 = vpop.f32.mrb[0].mxu0
    %711 = vdwg.mxu0
    %712 = vmatprep.subr.bf16.mxu0 0
    %713 = vmatpush1.bf16.msra.mxu0 %v456
    %714 = vmatprep.subr.bf16.mxu0 0
    %715 = vmatpush1.bf16.msra.mxu0 %v461
    %716 = vmatprep.subr.bf16.mxu0 0
    %717 = vmatpush1.bf16.msra.mxu0 %v466
    %718 = vmatprep.subr.bf16.mxu0 0
    %719 = vmatpush1.bf16.msra.mxu0 %v471
    %720 = vmatprep.subr.bf16.mxu0 0
    %721 = vmatpush1.bf16.msra.mxu0 %v476
    %722 = vmatprep.subr.bf16.mxu0 0
    %723 = vmatpush1.bf16.msra.mxu0 %v481
    %724 = vmatprep.subr.bf16.mxu0 0
    %725 = vmatpush1.bf16.msra.mxu0 %v486
    %726 = vmatprep.subr.bf16.mxu0 0
    %727 = vmatpush1.bf16.msra.mxu0 %v491
    %728 = vmatprep.subr.bf16.mxu0 0
    %729 = vmatpush1.bf16.msra.mxu0 %v496
    %730 = vmatprep.subr.bf16.mxu0 0
    %731 = vmatpush1.bf16.msra.mxu0 %v501
    %732 = vmatprep.subr.bf16.mxu0 0
    %733 = vmatpush1.bf16.msra.mxu0 %v506
    %734 = vmatprep.subr.bf16.mxu0 0
    %735 = vmatpush1.bf16.msra.mxu0 %v511
    %736 = vmatprep.subr.bf16.mxu0 0
    %737 = vmatpush1.bf16.msra.mxu0 %v516
    %738 = vmatprep.subr.bf16.mxu0 0
    %739 = vmatpush1.bf16.msra.mxu0 %v521
    %740 = vmatprep.subr.bf16.mxu0 0
    %741 = vmatpush1.bf16.msra.mxu0 %v526
    %742 = vmatprep.subr.bf16.mxu0 0
    %743 = vmatpush1.bf16.msra.mxu0 %v628
    %744 = vmatprep.mubr.bf16.mxu0 %v609
    %745 = vmatmul.mubr.bf16.gmra.mrb[0].mxu0 %v195
    %v746 = vpop.f32.mrb[0].mxu0
    %v747 = vadd.f32 %v174, %v746
    %v748 = vpop.f32.mrb[0].mxu0
    %v749 = vpop.f32.mrb[0].mxu0
    %v750 = vpop.f32.mrb[0].mxu0
    %751 = vdwg.mxu0
    %v752 = vmax.f32 %v665, 0.0
    %v753 = vmax.f32 %v667, 0.0
    %v754 = vmax.f32 %v706, 0.0
    %v755 = vmax.f32 %v708, 0.0
    %v756 = vmax.f32 %v747, 0.0
    %v757 = vpack.c.bf16 %v752, %v752
    %v758 = vpack.c.bf16 %v753, %v753
    %v759 = vpack.c.bf16 %v754, %v754
    %v760 = vpack.c.bf16 %v755, %v755
    %v761 = vpack.c.bf16 %v756, %v756
    %v762 = vld [vmem:[#allocation5] sm:$0xff]
    %v763 = vld [vmem:[#allocation5 + $0x8] sm:$0xff]
    %v764 = vld [vmem:[#allocation5 + $0x10] sm:$0xff]
    %v765 = vld [vmem:[#allocation5 + $0x18] sm:$0xff]
    %v766 = vld [vmem:[#allocation5 + $0x20] sm:$0xff]
    %v767 = vld [vmem:[#allocation5 + $0x28] sm:$0xff]
    %v768 = vld [vmem:[#allocation5 + $0x30] sm:$0xff]
    %v769 = vld [vmem:[#allocation5 + $0x38] sm:$0xff]
    %v770 = vld [vmem:[#allocation5 + $0x40] sm:$0xff]
    %v771 = vld [vmem:[#allocation5 + $0x48] sm:$0xff]
    %v772 = vld [vmem:[#allocation5 + $0x50] sm:$0xff]
    %v773 = vld [vmem:[#allocation5 + $0x58] sm:$0xff]
    %v774 = vld [vmem:[#allocation5 + $0x60] sm:$0xff]
    %v775 = vld [vmem:[#allocation5 + $0x68] sm:$0xff]
    %v776 = vld [vmem:[#allocation5 + $0x70] sm:$0xff]
    %v777 = vld [vmem:[#allocation5 + $0x78] sm:$0xff]
    %v778 = vld [vmem:[#allocation5 + $0x80] sm:$0xff]
    %v779 = vld [vmem:[#allocation5 + $0x88] sm:$0xff]
    %v780 = vld [vmem:[#allocation5 + $0x90] sm:$0xff]
    %v781 = vld [vmem:[#allocation5 + $0x98] sm:$0xff]
    %v782 = vld [vmem:[#allocation5 + $0xa0] sm:$0xff]
    %v783 = vld [vmem:[#allocation5 + $0xa8] sm:$0xff]
    %v784 = vld [vmem:[#allocation5 + $0xb0] sm:$0xff]
    %v785 = vld [vmem:[#allocation5 + $0xb8] sm:$0xff]
    %v786 = vld [vmem:[#allocation5 + $0xc0] sm:$0xff]
    %v787 = vld [vmem:[#allocation5 + $0xc8] sm:$0xff]
    %v788 = vld [vmem:[#allocation5 + $0xd0] sm:$0xff]
    %v789 = vld [vmem:[#allocation5 + $0xd8] sm:$0xff]
    %v790 = vld [vmem:[#allocation5 + $0xe0] sm:$0xff]
    %v791 = vld [vmem:[#allocation5 + $0xe8] sm:$0xff]
    %v792 = vld [vmem:[#allocation5 + $0xf0] sm:$0xff]
    %v793 = vld [vmem:[#allocation5 + $0xf8] sm:$0xff]
    %v794 = vld [vmem:[#allocation5 + $0x100] sm:$0xff]
    %v795 = vld [vmem:[#allocation5 + $0x108] sm:$0xff]
    %v796 = vld [vmem:[#allocation5 + $0x110] sm:$0xff]
    %v797 = vld [vmem:[#allocation5 + $0x118] sm:$0xff]
    %v798 = vld [vmem:[#allocation5 + $0x120] sm:$0xff]
    %v799 = vld [vmem:[#allocation5 + $0x128] sm:$0xff]
    %v800 = vld [vmem:[#allocation5 + $0x130] sm:$0xff]
    %v801 = vld [vmem:[#allocation5 + $0x138] sm:$0xff]
    %v802 = vld [vmem:[#allocation5 + $0x140] sm:$0xff]
    %v803 = vld [vmem:[#allocation5 + $0x148] sm:$0xff]
    %v804 = vld [vmem:[#allocation5 + $0x150] sm:$0xff]
    %v805 = vld [vmem:[#allocation5 + $0x158] sm:$0xff]
    %v806 = vld [vmem:[#allocation5 + $0x160] sm:$0xff]
    %v807 = vld [vmem:[#allocation5 + $0x168] sm:$0xff]
    %v808 = vld [vmem:[#allocation5 + $0x170] sm:$0xff]
    %v809 = vld [vmem:[#allocation5 + $0x178] sm:$0xff]
    %v810 = vld [vmem:[#allocation5 + $0x180] sm:$0xff]
    %v811 = vld [vmem:[#allocation5 + $0x188] sm:$0xff]
    %v812 = vld [vmem:[#allocation5 + $0x190] sm:$0xff]
    %v813 = vld [vmem:[#allocation5 + $0x198] sm:$0xff]
    %v814 = vld [vmem:[#allocation5 + $0x1a0] sm:$0xff]
    %v815 = vld [vmem:[#allocation5 + $0x1a8] sm:$0xff]
    %v816 = vld [vmem:[#allocation5 + $0x1b0] sm:$0xff]
    %v817 = vld [vmem:[#allocation5 + $0x1b8] sm:$0xff]
    %v818 = vld [vmem:[#allocation5 + $0x1c0] sm:$0xff]
    %v819 = vld [vmem:[#allocation5 + $0x1c8] sm:$0xff]
    %v820 = vld [vmem:[#allocation5 + $0x1d0] sm:$0xff]
    %v821 = vld [vmem:[#allocation5 + $0x1d8] sm:$0xff]
    %v822 = vld [vmem:[#allocation5 + $0x1e0] sm:$0xff]
    %v823 = vld [vmem:[#allocation5 + $0x1e8] sm:$0xff]
    %v824 = vld [vmem:[#allocation5 + $0x1f0] sm:$0xff]
    %v825 = vld [vmem:[#allocation5 + $0x1f8] sm:$0xff]
    %v826 = vld [vmem:[#allocation5 + $0x200] sm:$0xff]
    %v827 = vld [vmem:[#allocation5 + $0x208] sm:$0xff]
    %v828 = vld [vmem:[#allocation5 + $0x210] sm:$0xff]
    %v829 = vld [vmem:[#allocation5 + $0x218] sm:$0xff]
    %v830 = vld [vmem:[#allocation5 + $0x220] sm:$0xff]
    %v831 = vld [vmem:[#allocation5 + $0x228] sm:$0xff]
    %v832 = vld [vmem:[#allocation5 + $0x230] sm:$0xff]
    %v833 = vld [vmem:[#allocation5 + $0x238] sm:$0xff]
    %v834 = vld [vmem:[#allocation5 + $0x240] sm:$0xff]
    %v835 = vld [vmem:[#allocation5 + $0x248] sm:$0xff]
    %v836 = vld [vmem:[#allocation5 + $0x250] sm:$0xff]
    %v837 = vld [vmem:[#allocation5 + $0x258] sm:$0xff]
    %v838 = vld [vmem:[#allocation5 + $0x260] sm:$0xff]
    %v839 = vld [vmem:[#allocation5 + $0x268] sm:$0xff]
    %v840 = vld [vmem:[#allocation5 + $0x270] sm:$0xff]
    %v841 = vld [vmem:[#allocation5 + $0x278] sm:$0xff]
    %v842 = vld [vmem:[#allocation5 + $0x280] sm:$0xff]
    %v843 = vld [vmem:[#allocation5 + $0x288] sm:$0xff]
    %v844 = vld [vmem:[#allocation5 + $0x290] sm:$0xff]
    %v845 = vld [vmem:[#allocation5 + $0x298] sm:$0xff]
    %v846 = vld [vmem:[#allocation5 + $0x2a0] sm:$0xff]
    %v847 = vld [vmem:[#allocation5 + $0x2a8] sm:$0xff]
    %v848 = vld [vmem:[#allocation5 + $0x2b0] sm:$0xff]
    %v849 = vld [vmem:[#allocation5 + $0x2b8] sm:$0xff]
    %v850 = vld [vmem:[#allocation5 + $0x2c0] sm:$0xff]
    %v851 = vld [vmem:[#allocation5 + $0x2c8] sm:$0xff]
    %v852 = vld [vmem:[#allocation5 + $0x2d0] sm:$0xff]
    %v853 = vld [vmem:[#allocation5 + $0x2d8] sm:$0xff]
    %v854 = vld [vmem:[#allocation5 + $0x2e0] sm:$0xff]
    %v855 = vld [vmem:[#allocation5 + $0x2e8] sm:$0xff]
    %v856 = vld [vmem:[#allocation5 + $0x2f0] sm:$0xff]
    %v857 = vld [vmem:[#allocation5 + $0x2f8] sm:$0xff]
    %v858 = vld [vmem:[#allocation5 + $0x300] sm:$0xff]
    %v859 = vld [vmem:[#allocation5 + $0x308] sm:$0xff]
    %v860 = vld [vmem:[#allocation5 + $0x310] sm:$0xff]
    %v861 = vld [vmem:[#allocation5 + $0x318] sm:$0xff]
    %v862 = vld [vmem:[#allocation5 + $0x320] sm:$0xff]
    %v863 = vld [vmem:[#allocation5 + $0x328] sm:$0xff]
    %v864 = vld [vmem:[#allocation5 + $0x330] sm:$0xff]
    %v865 = vld [vmem:[#allocation5 + $0x338] sm:$0xff]
    %v866 = vld [vmem:[#allocation5 + $0x340] sm:$0xff]
    %v867 = vld [vmem:[#allocation5 + $0x348] sm:$0xff]
    %v868 = vld [vmem:[#allocation5 + $0x350] sm:$0xff]
    %v869 = vld [vmem:[#allocation5 + $0x358] sm:$0xff]
    %v870 = vld [vmem:[#allocation5 + $0x360] sm:$0xff]
    %v871 = vld [vmem:[#allocation5 + $0x368] sm:$0xff]
    %v872 = vld [vmem:[#allocation5 + $0x370] sm:$0xff]
    %v873 = vld [vmem:[#allocation5 + $0x378] sm:$0xff]
    %v874 = vld [vmem:[#allocation5 + $0x380] sm:$0xff]
    %v875 = vld [vmem:[#allocation5 + $0x388] sm:$0xff]
    %v876 = vld [vmem:[#allocation5 + $0x390] sm:$0xff]
    %v877 = vld [vmem:[#allocation5 + $0x398] sm:$0xff]
    %v878 = vld [vmem:[#allocation5 + $0x3a0] sm:$0xff]
    %v879 = vld [vmem:[#allocation5 + $0x3a8] sm:$0xff]
    %v880 = vld [vmem:[#allocation5 + $0x3b0] sm:$0xff]
    %v881 = vld [vmem:[#allocation5 + $0x3b8] sm:$0xff]
    %v882 = vld [vmem:[#allocation5 + $0x3c0] sm:$0xff]
    %v883 = vld [vmem:[#allocation5 + $0x3c8] sm:$0xff]
    %v884 = vld [vmem:[#allocation5 + $0x3d0] sm:$0xff]
    %v885 = vld [vmem:[#allocation5 + $0x3d8] sm:$0xff]
    %v886 = vld [vmem:[#allocation5 + $0x3e0] sm:$0xff]
    %v887 = vld [vmem:[#allocation5 + $0x3e8] sm:$0xff]
    %v888 = vld [vmem:[#allocation5 + $0x3f0] sm:$0xff]
    %v889 = vld [vmem:[#allocation5 + $0x3f8] sm:$0xff]
    %v890 = vld [vmem:[#allocation5 + $0x400] sm:$0xff]
    %v891 = vld [vmem:[#allocation5 + $0x408] sm:$0xff]
    %v892 = vld [vmem:[#allocation5 + $0x410] sm:$0xff]
    %v893 = vld [vmem:[#allocation5 + $0x418] sm:$0xff]
    %v894 = vld [vmem:[#allocation5 + $0x420] sm:$0xff]
    %v895 = vld [vmem:[#allocation5 + $0x428] sm:$0xff]
    %v896 = vld [vmem:[#allocation5 + $0x430] sm:$0xff]
    %v897 = vld [vmem:[#allocation5 + $0x438] sm:$0xff]
    %v898 = vld [vmem:[#allocation5 + $0x440] sm:$0xff]
    %v899 = vld [vmem:[#allocation5 + $0x448] sm:$0xff]
    %v900 = vld [vmem:[#allocation5 + $0x450] sm:$0xff]
    %v901 = vld [vmem:[#allocation5 + $0x458] sm:$0xff]
    %v902 = vld [vmem:[#allocation5 + $0x460] sm:$0xff]
    %v903 = vld [vmem:[#allocation5 + $0x468] sm:$0xff]
    %v904 = vld [vmem:[#allocation5 + $0x470] sm:$0xff]
    %v905 = vld [vmem:[#allocation5 + $0x478] sm:$0xff]
    %v906 = vld [vmem:[#allocation5 + $0x480] sm:$0xff]
    %v907 = vld [vmem:[#allocation5 + $0x488] sm:$0xff]
    %v908 = vld [vmem:[#allocation5 + $0x490] sm:$0xff]
    %v909 = vld [vmem:[#allocation5 + $0x498] sm:$0xff]
    %v910 = vld [vmem:[#allocation5 + $0x4a0] sm:$0xff]
    %v911 = vld [vmem:[#allocation5 + $0x4a8] sm:$0xff]
    %v912 = vld [vmem:[#allocation5 + $0x4b0] sm:$0xff]
    %v913 = vld [vmem:[#allocation5 + $0x4b8] sm:$0xff]
    %v914 = vld [vmem:[#allocation5 + $0x4c0] sm:$0xff]
    %v915 = vld [vmem:[#allocation5 + $0x4c8] sm:$0xff]
    %v916 = vld [vmem:[#allocation5 + $0x4d0] sm:$0xff]
    %v917 = vld [vmem:[#allocation5 + $0x4d8] sm:$0xff]
    %v918 = vld [vmem:[#allocation5 + $0x4e0] sm:$0xff]
    %v919 = vld [vmem:[#allocation5 + $0x4e8] sm:$0xff]
    %v920 = vld [vmem:[#allocation5 + $0x4f0] sm:$0xff]
    %v921 = vld [vmem:[#allocation5 + $0x4f8] sm:$0xff]
    %v922 = vld [vmem:[#allocation5 + $0x500] sm:$0xff]
    %v923 = vld [vmem:[#allocation5 + $0x508] sm:$0xff]
    %v924 = vld [vmem:[#allocation5 + $0x510] sm:$0xff]
    %v925 = vld [vmem:[#allocation5 + $0x518] sm:$0xff]
    %v926 = vld [vmem:[#allocation5 + $0x520] sm:$0xff]
    %v927 = vld [vmem:[#allocation5 + $0x528] sm:$0xff]
    %v928 = vld [vmem:[#allocation5 + $0x530] sm:$0xff]
    %v929 = vld [vmem:[#allocation5 + $0x538] sm:$0xff]
    %v930 = vld [vmem:[#allocation5 + $0x540] sm:$0xff]
    %v931 = vld [vmem:[#allocation5 + $0x548] sm:$0xff]
    %v932 = vld [vmem:[#allocation5 + $0x550] sm:$0xff]
    %v933 = vld [vmem:[#allocation5 + $0x558] sm:$0xff]
    %v934 = vld [vmem:[#allocation5 + $0x560] sm:$0xff]
    %v935 = vld [vmem:[#allocation5 + $0x568] sm:$0xff]
    %v936 = vld [vmem:[#allocation5 + $0x570] sm:$0xff]
    %v937 = vld [vmem:[#allocation5 + $0x578] sm:$0xff]
    %v938 = vld [vmem:[#allocation5 + $0x580] sm:$0xff]
    %v939 = vld [vmem:[#allocation5 + $0x588] sm:$0xff]
    %v940 = vld [vmem:[#allocation5 + $0x590] sm:$0xff]
    %v941 = vld [vmem:[#allocation5 + $0x598] sm:$0xff]
    %v942 = vld [vmem:[#allocation5 + $0x5a0] sm:$0xff]
    %v943 = vld [vmem:[#allocation5 + $0x5a8] sm:$0xff]
    %v944 = vld [vmem:[#allocation5 + $0x5b0] sm:$0xff]
    %v945 = vld [vmem:[#allocation5 + $0x5b8] sm:$0xff]
    %v946 = vld [vmem:[#allocation5 + $0x5c0] sm:$0xff]
    %v947 = vld [vmem:[#allocation5 + $0x5c8] sm:$0xff]
    %v948 = vld [vmem:[#allocation5 + $0x5d0] sm:$0xff]
    %v949 = vld [vmem:[#allocation5 + $0x5d8] sm:$0xff]
    %v950 = vld [vmem:[#allocation5 + $0x5e0] sm:$0xff]
    %v951 = vld [vmem:[#allocation5 + $0x5e8] sm:$0xff]
    %v952 = vld [vmem:[#allocation5 + $0x5f0] sm:$0xff]
    %v953 = vld [vmem:[#allocation5 + $0x5f8] sm:$0xff]
    %v954 = vld [vmem:[#allocation5 + $0x600] sm:$0xff]
    %v955 = vld [vmem:[#allocation5 + $0x608] sm:$0xff]
    %v956 = vld [vmem:[#allocation5 + $0x610] sm:$0xff]
    %v957 = vld [vmem:[#allocation5 + $0x618] sm:$0xff]
    %v958 = vld [vmem:[#allocation5 + $0x620] sm:$0xff]
    %v959 = vld [vmem:[#allocation5 + $0x628] sm:$0xff]
    %v960 = vld [vmem:[#allocation5 + $0x630] sm:$0xff]
    %v961 = vld [vmem:[#allocation5 + $0x638] sm:$0xff]
    %v962 = vld [vmem:[#allocation5 + $0x640] sm:$0xff]
    %v963 = vld [vmem:[#allocation5 + $0x648] sm:$0xff]
    %v964 = vld [vmem:[#allocation5 + $0x650] sm:$0xff]
    %v965 = vld [vmem:[#allocation5 + $0x658] sm:$0xff]
    %v966 = vld [vmem:[#allocation5 + $0x660] sm:$0xff]
    %v967 = vld [vmem:[#allocation5 + $0x668] sm:$0xff]
    %v968 = vld [vmem:[#allocation5 + $0x670] sm:$0xff]
    %v969 = vld [vmem:[#allocation5 + $0x678] sm:$0xff]
    %v970 = vld [vmem:[#allocation5 + $0x680] sm:$0xff]
    %v971 = vld [vmem:[#allocation5 + $0x688] sm:$0xff]
    %v972 = vld [vmem:[#allocation5 + $0x690] sm:$0xff]
    %v973 = vld [vmem:[#allocation5 + $0x698] sm:$0xff]
    %v974 = vld [vmem:[#allocation5 + $0x6a0] sm:$0xff]
    %v975 = vld [vmem:[#allocation5 + $0x6a8] sm:$0xff]
    %v976 = vld [vmem:[#allocation5 + $0x6b0] sm:$0xff]
    %v977 = vld [vmem:[#allocation5 + $0x6b8] sm:$0xff]
    %v978 = vld [vmem:[#allocation5 + $0x6c0] sm:$0xff]
    %v979 = vld [vmem:[#allocation5 + $0x6c8] sm:$0xff]
    %v980 = vld [vmem:[#allocation5 + $0x6d0] sm:$0xff]
    %v981 = vld [vmem:[#allocation5 + $0x6d8] sm:$0xff]
    %v982 = vld [vmem:[#allocation5 + $0x6e0] sm:$0xff]
    %v983 = vld [vmem:[#allocation5 + $0x6e8] sm:$0xff]
    %v984 = vld [vmem:[#allocation5 + $0x6f0] sm:$0xff]
    %v985 = vld [vmem:[#allocation5 + $0x6f8] sm:$0xff]
    %v986 = vld [vmem:[#allocation5 + $0x700] sm:$0xff]
    %v987 = vld [vmem:[#allocation5 + $0x708] sm:$0xff]
    %v988 = vld [vmem:[#allocation5 + $0x710] sm:$0xff]
    %v989 = vld [vmem:[#allocation5 + $0x718] sm:$0xff]
    %v990 = vld [vmem:[#allocation5 + $0x720] sm:$0xff]
    %v991 = vld [vmem:[#allocation5 + $0x728] sm:$0xff]
    %v992 = vld [vmem:[#allocation5 + $0x730] sm:$0xff]
    %v993 = vld [vmem:[#allocation5 + $0x738] sm:$0xff]
    %v994 = vld [vmem:[#allocation5 + $0x740] sm:$0xff]
    %v995 = vld [vmem:[#allocation5 + $0x748] sm:$0xff]
    %v996 = vld [vmem:[#allocation5 + $0x750] sm:$0xff]
    %v997 = vld [vmem:[#allocation5 + $0x758] sm:$0xff]
    %v998 = vld [vmem:[#allocation5 + $0x760] sm:$0xff]
    %v999 = vld [vmem:[#allocation5 + $0x768] sm:$0xff]
    %v1000 = vld [vmem:[#allocation5 + $0x770] sm:$0xff]
    %v1001 = vld [vmem:[#allocation5 + $0x778] sm:$0xff]
    %v1002 = vld [vmem:[#allocation5 + $0x780] sm:$0xff]
    %v1003 = vld [vmem:[#allocation5 + $0x788] sm:$0xff]
    %v1004 = vld [vmem:[#allocation5 + $0x790] sm:$0xff]
    %v1005 = vld [vmem:[#allocation5 + $0x798] sm:$0xff]
    %v1006 = vld [vmem:[#allocation5 + $0x7a0] sm:$0xff]
    %v1007 = vld [vmem:[#allocation5 + $0x7a8] sm:$0xff]
    %v1008 = vld [vmem:[#allocation5 + $0x7b0] sm:$0xff]
    %v1009 = vld [vmem:[#allocation5 + $0x7b8] sm:$0xff]
    %v1010 = vld [vmem:[#allocation5 + $0x7c0] sm:$0xff]
    %v1011 = vld [vmem:[#allocation5 + $0x7c8] sm:$0xff]
    %v1012 = vld [vmem:[#allocation5 + $0x7d0] sm:$0xff]
    %v1013 = vld [vmem:[#allocation5 + $0x7d8] sm:$0xff]
    %v1014 = vld [vmem:[#allocation5 + $0x7e0] sm:$0xff]
    %v1015 = vld [vmem:[#allocation5 + $0x7e8] sm:$0xff]
    %v1016 = vld [vmem:[#allocation5 + $0x7f0] sm:$0xff]
    %v1017 = vld [vmem:[#allocation5 + $0x7f8] sm:$0xff]
    %v1018 = vld [vmem:[#allocation5 + $0x800] sm:$0xff]
    %v1019 = vld [vmem:[#allocation5 + $0x808] sm:$0xff]
    %v1020 = vld [vmem:[#allocation5 + $0x810] sm:$0xff]
    %v1021 = vld [vmem:[#allocation5 + $0x818] sm:$0xff]
    %v1022 = vld [vmem:[#allocation5 + $0x820] sm:$0xff]
    %v1023 = vld [vmem:[#allocation5 + $0x828] sm:$0xff]
    %v1024 = vld [vmem:[#allocation5 + $0x830] sm:$0xff]
    %v1025 = vld [vmem:[#allocation5 + $0x838] sm:$0xff]
    %v1026 = vld [vmem:[#allocation5 + $0x840] sm:$0xff]
    %v1027 = vld [vmem:[#allocation5 + $0x848] sm:$0xff]
    %v1028 = vld [vmem:[#allocation5 + $0x850] sm:$0xff]
    %v1029 = vld [vmem:[#allocation5 + $0x858] sm:$0xff]
    %v1030 = vld [vmem:[#allocation5 + $0x860] sm:$0xff]
    %v1031 = vld [vmem:[#allocation5 + $0x868] sm:$0xff]
    %v1032 = vld [vmem:[#allocation5 + $0x870] sm:$0xff]
    %v1033 = vld [vmem:[#allocation5 + $0x878] sm:$0xff]
    %v1034 = vld [vmem:[#allocation5 + $0x880] sm:$0xff]
    %v1035 = vld [vmem:[#allocation5 + $0x888] sm:$0xff]
    %v1036 = vld [vmem:[#allocation5 + $0x890] sm:$0xff]
    %v1037 = vld [vmem:[#allocation5 + $0x898] sm:$0xff]
    %v1038 = vld [vmem:[#allocation5 + $0x8a0] sm:$0xff]
    %v1039 = vld [vmem:[#allocation5 + $0x8a8] sm:$0xff]
    %v1040 = vld [vmem:[#allocation5 + $0x8b0] sm:$0xff]
    %v1041 = vld [vmem:[#allocation5 + $0x8b8] sm:$0xff]
    %v1042 = vld [vmem:[#allocation5 + $0x8c0] sm:$0xff]
    %v1043 = vld [vmem:[#allocation5 + $0x8c8] sm:$0xff]
    %v1044 = vld [vmem:[#allocation5 + $0x8d0] sm:$0xff]
    %v1045 = vld [vmem:[#allocation5 + $0x8d8] sm:$0xff]
    %v1046 = vld [vmem:[#allocation5 + $0x8e0] sm:$0xff]
    %v1047 = vld [vmem:[#allocation5 + $0x8e8] sm:$0xff]
    %v1048 = vld [vmem:[#allocation5 + $0x8f0] sm:$0xff]
    %v1049 = vld [vmem:[#allocation5 + $0x8f8] sm:$0xff]
    %v1050 = vld [vmem:[#allocation7] sm:$0xff]
    %v1052 = vlaneseq
    %v1053 = vshrl.u32 %v1052, 7
    %v1054 = vsub.s32 0, %v1053
    %v1055 = vrot.slane %v1050, %v1054
    %v1056 = vlaneseq
    %v1057 = vshrl.u32 %v1056, 7
    %v1058 = vsub.s32 1, %v1057
    %v1059 = vrot.slane %v1050, %v1058
    %v1060 = vlaneseq
    %v1061 = vshrl.u32 %v1060, 7
    %v1062 = vsub.s32 2, %v1061
    %v1063 = vrot.slane %v1050, %v1062
    %v1064 = vlaneseq
    %v1065 = vshrl.u32 %v1064, 7
    %v1066 = vsub.s32 3, %v1065
    %v1067 = vrot.slane %v1050, %v1066
    %v1068 = vlaneseq
    %v1069 = vshrl.u32 %v1068, 7
    %v1070 = vsub.s32 4, %v1069
    %v1071 = vrot.slane %v1050, %v1070
    %v1072 = vlaneseq
    %v1073 = vshrl.u32 %v1072, 7
    %v1074 = vsub.s32 5, %v1073
    %v1075 = vrot.slane %v1050, %v1074
    %v1076 = vlaneseq
    %v1077 = vshrl.u32 %v1076, 7
    %v1078 = vsub.s32 6, %v1077
    %v1079 = vrot.slane %v1050, %v1078
    %v1080 = vlaneseq
    %v1081 = vshrl.u32 %v1080, 7
    %v1082 = vsub.s32 7, %v1081
    %v1083 = vrot.slane %v1050, %v1082
    %v1380 = vunpack.c.l.b16 %v762
    %v1381 = vunpack.c.h.b16 %v762
    %v1382 = vunpack.c.l.b16 %v763
    %v1383 = vunpack.c.h.b16 %v763
    %v1384 = vunpack.c.l.b16 %v764
    %v1385 = vunpack.c.h.b16 %v764
    %v1386 = vunpack.c.l.b16 %v765
    %v1387 = vunpack.c.h.b16 %v765
    %v1388 = vunpack.c.l.b16 %v766
    %v1389 = vunpack.c.h.b16 %v766
    %v1390 = vunpack.c.l.b16 %v767
    %v1391 = vunpack.c.h.b16 %v767
    %v1392 = vunpack.c.l.b16 %v768
    %v1393 = vunpack.c.h.b16 %v768
    %v1394 = vunpack.c.l.b16 %v769
    %v1395 = vunpack.c.h.b16 %v769
    %v1396 = vunpack.c.l.b16 %v770
    %v1397 = vunpack.c.h.b16 %v770
    %v1398 = vunpack.c.l.b16 %v771
    %v1399 = vunpack.c.h.b16 %v771
    %v1400 = vunpack.c.l.b16 %v772
    %v1401 = vunpack.c.h.b16 %v772
    %v1402 = vunpack.c.l.b16 %v773
    %v1403 = vunpack.c.h.b16 %v773
    %v1404 = vunpack.c.l.b16 %v774
    %v1405 = vunpack.c.h.b16 %v774
    %v1406 = vunpack.c.l.b16 %v775
    %v1407 = vunpack.c.h.b16 %v775
    %v1408 = vunpack.c.l.b16 %v776
    %v1409 = vunpack.c.h.b16 %v776
    %v1410 = vunpack.c.l.b16 %v777
    %v1411 = vunpack.c.h.b16 %v777
    %v1412 = vunpack.c.l.b16 %v778
    %v1413 = vunpack.c.h.b16 %v778
    %v1414 = vunpack.c.l.b16 %v779
    %v1415 = vunpack.c.h.b16 %v779
    %v1416 = vunpack.c.l.b16 %v780
    %v1417 = vunpack.c.h.b16 %v780
    %v1418 = vunpack.c.l.b16 %v781
    %v1419 = vunpack.c.h.b16 %v781
    %v1420 = vunpack.c.l.b16 %v782
    %v1421 = vunpack.c.h.b16 %v782
    %v1422 = vunpack.c.l.b16 %v783
    %v1423 = vunpack.c.h.b16 %v783
    %v1424 = vunpack.c.l.b16 %v784
    %v1425 = vunpack.c.h.b16 %v784
    %v1426 = vunpack.c.l.b16 %v785
    %v1427 = vunpack.c.h.b16 %v785
    %v1428 = vunpack.c.l.b16 %v786
    %v1429 = vunpack.c.h.b16 %v786
    %v1430 = vunpack.c.l.b16 %v787
    %v1431 = vunpack.c.h.b16 %v787
    %v1432 = vunpack.c.l.b16 %v788
    %v1433 = vunpack.c.h.b16 %v788
    %v1434 = vunpack.c.l.b16 %v789
    %v1435 = vunpack.c.h.b16 %v789
    %v1436 = vunpack.c.l.b16 %v790
    %v1437 = vunpack.c.h.b16 %v790
    %v1438 = vunpack.c.l.b16 %v791
    %v1439 = vunpack.c.h.b16 %v791
    %v1440 = vunpack.c.l.b16 %v792
    %v1441 = vunpack.c.h.b16 %v792
    %v1442 = vunpack.c.l.b16 %v793
    %v1443 = vunpack.c.h.b16 %v793
    %v1444 = vunpack.c.l.b16 %v794
    %v1445 = vunpack.c.h.b16 %v794
    %v1446 = vunpack.c.l.b16 %v795
    %v1447 = vunpack.c.h.b16 %v795
    %v1448 = vunpack.c.l.b16 %v796
    %v1449 = vunpack.c.h.b16 %v796
    %v1450 = vunpack.c.l.b16 %v797
    %v1451 = vunpack.c.h.b16 %v797
    %v1452 = vunpack.c.l.b16 %v798
    %v1453 = vunpack.c.h.b16 %v798
    %v1454 = vunpack.c.l.b16 %v799
    %v1455 = vunpack.c.h.b16 %v799
    %v1456 = vunpack.c.l.b16 %v800
    %v1457 = vunpack.c.h.b16 %v800
    %v1458 = vunpack.c.l.b16 %v801
    %v1459 = vunpack.c.h.b16 %v801
    %v1460 = vunpack.c.l.b16 %v802
    %v1461 = vunpack.c.h.b16 %v802
    %v1462 = vunpack.c.l.b16 %v803
    %v1463 = vunpack.c.h.b16 %v803
    %v1464 = vunpack.c.l.b16 %v804
    %v1465 = vunpack.c.h.b16 %v804
    %v1466 = vunpack.c.l.b16 %v805
    %v1467 = vunpack.c.h.b16 %v805
    %v1468 = vunpack.c.l.b16 %v806
    %v1469 = vunpack.c.h.b16 %v806
    %v1470 = vunpack.c.l.b16 %v807
    %v1471 = vunpack.c.h.b16 %v807
    %v1472 = vunpack.c.l.b16 %v808
    %v1473 = vunpack.c.h.b16 %v808
    %v1474 = vunpack.c.l.b16 %v809
    %v1475 = vunpack.c.h.b16 %v809
    %v1476 = vunpack.c.l.b16 %v810
    %v1477 = vunpack.c.h.b16 %v810
    %v1478 = vunpack.c.l.b16 %v811
    %v1479 = vunpack.c.h.b16 %v811
    %v1480 = vunpack.c.l.b16 %v812
    %v1481 = vunpack.c.h.b16 %v812
    %v1482 = vunpack.c.l.b16 %v813
    %v1483 = vunpack.c.h.b16 %v813
    %v1484 = vunpack.c.l.b16 %v814
    %v1485 = vunpack.c.h.b16 %v814
    %v1486 = vunpack.c.l.b16 %v815
    %v1487 = vunpack.c.h.b16 %v815
    %v1488 = vunpack.c.l.b16 %v816
    %v1489 = vunpack.c.h.b16 %v816
    %v1490 = vunpack.c.l.b16 %v817
    %v1491 = vunpack.c.h.b16 %v817
    %v1492 = vunpack.c.l.b16 %v818
    %v1493 = vunpack.c.h.b16 %v818
    %v1494 = vunpack.c.l.b16 %v819
    %v1495 = vunpack.c.h.b16 %v819
    %v1496 = vunpack.c.l.b16 %v820
    %v1497 = vunpack.c.h.b16 %v820
    %v1498 = vunpack.c.l.b16 %v821
    %v1499 = vunpack.c.h.b16 %v821
    %v1500 = vunpack.c.l.b16 %v822
    %v1501 = vunpack.c.h.b16 %v822
    %v1502 = vunpack.c.l.b16 %v823
    %v1503 = vunpack.c.h.b16 %v823
    %v1504 = vunpack.c.l.b16 %v824
    %v1505 = vunpack.c.h.b16 %v824
    %v1506 = vunpack.c.l.b16 %v825
    %v1507 = vunpack.c.h.b16 %v825
    %v1508 = vunpack.c.l.b16 %v826
    %v1509 = vunpack.c.h.b16 %v826
    %v1510 = vunpack.c.l.b16 %v827
    %v1511 = vunpack.c.h.b16 %v827
    %v1512 = vunpack.c.l.b16 %v828
    %v1513 = vunpack.c.h.b16 %v828
    %v1514 = vunpack.c.l.b16 %v829
    %v1515 = vunpack.c.h.b16 %v829
    %v1516 = vunpack.c.l.b16 %v830
    %v1517 = vunpack.c.h.b16 %v830
    %v1518 = vunpack.c.l.b16 %v831
    %v1519 = vunpack.c.h.b16 %v831
    %v1520 = vunpack.c.l.b16 %v832
    %v1521 = vunpack.c.h.b16 %v832
    %v1522 = vunpack.c.l.b16 %v833
    %v1523 = vunpack.c.h.b16 %v833
    %v1524 = vunpack.c.l.b16 %v834
    %v1525 = vunpack.c.h.b16 %v834
    %v1526 = vunpack.c.l.b16 %v835
    %v1527 = vunpack.c.h.b16 %v835
    %v1528 = vunpack.c.l.b16 %v836
    %v1529 = vunpack.c.h.b16 %v836
    %v1530 = vunpack.c.l.b16 %v837
    %v1531 = vunpack.c.h.b16 %v837
    %v1532 = vunpack.c.l.b16 %v838
    %v1533 = vunpack.c.h.b16 %v838
    %v1534 = vunpack.c.l.b16 %v839
    %v1535 = vunpack.c.h.b16 %v839
    %v1536 = vunpack.c.l.b16 %v840
    %v1537 = vunpack.c.h.b16 %v840
    %v1538 = vunpack.c.l.b16 %v841
    %v1539 = vunpack.c.h.b16 %v841
    %v1540 = vunpack.c.l.b16 %v842
    %v1541 = vunpack.c.h.b16 %v842
    %v1542 = vunpack.c.l.b16 %v843
    %v1543 = vunpack.c.h.b16 %v843
    %v1544 = vunpack.c.l.b16 %v844
    %v1545 = vunpack.c.h.b16 %v844
    %v1546 = vunpack.c.l.b16 %v845
    %v1547 = vunpack.c.h.b16 %v845
    %v1548 = vunpack.c.l.b16 %v846
    %v1549 = vunpack.c.h.b16 %v846
    %v1550 = vunpack.c.l.b16 %v847
    %v1551 = vunpack.c.h.b16 %v847
    %v1552 = vunpack.c.l.b16 %v848
    %v1553 = vunpack.c.h.b16 %v848
    %v1554 = vunpack.c.l.b16 %v849
    %v1555 = vunpack.c.h.b16 %v849
    %v1556 = vunpack.c.l.b16 %v850
    %v1557 = vunpack.c.h.b16 %v850
    %v1558 = vunpack.c.l.b16 %v851
    %v1559 = vunpack.c.h.b16 %v851
    %v1560 = vunpack.c.l.b16 %v852
    %v1561 = vunpack.c.h.b16 %v852
    %v1562 = vunpack.c.l.b16 %v853
    %v1563 = vunpack.c.h.b16 %v853
    %v1564 = vunpack.c.l.b16 %v854
    %v1565 = vunpack.c.h.b16 %v854
    %v1566 = vunpack.c.l.b16 %v855
    %v1567 = vunpack.c.h.b16 %v855
    %v1568 = vunpack.c.l.b16 %v856
    %v1569 = vunpack.c.h.b16 %v856
    %v1570 = vunpack.c.l.b16 %v857
    %v1571 = vunpack.c.h.b16 %v857
    %v1572 = vunpack.c.l.b16 %v858
    %v1573 = vunpack.c.h.b16 %v858
    %v1574 = vunpack.c.l.b16 %v859
    %v1575 = vunpack.c.h.b16 %v859
    %v1576 = vunpack.c.l.b16 %v860
    %v1577 = vunpack.c.h.b16 %v860
    %v1578 = vunpack.c.l.b16 %v861
    %v1579 = vunpack.c.h.b16 %v861
    %v1580 = vunpack.c.l.b16 %v862
    %v1581 = vunpack.c.h.b16 %v862
    %v1582 = vunpack.c.l.b16 %v863
    %v1583 = vunpack.c.h.b16 %v863
    %v1584 = vunpack.c.l.b16 %v864
    %v1585 = vunpack.c.h.b16 %v864
    %v1586 = vunpack.c.l.b16 %v865
    %v1587 = vunpack.c.h.b16 %v865
    %v1588 = vunpack.c.l.b16 %v866
    %v1589 = vunpack.c.h.b16 %v866
    %v1590 = vunpack.c.l.b16 %v867
    %v1591 = vunpack.c.h.b16 %v867
    %v1592 = vunpack.c.l.b16 %v868
    %v1593 = vunpack.c.h.b16 %v868
    %v1594 = vunpack.c.l.b16 %v869
    %v1595 = vunpack.c.h.b16 %v869
    %v1596 = vunpack.c.l.b16 %v870
    %v1597 = vunpack.c.h.b16 %v870
    %v1598 = vunpack.c.l.b16 %v871
    %v1599 = vunpack.c.h.b16 %v871
    %v1600 = vunpack.c.l.b16 %v872
    %v1601 = vunpack.c.h.b16 %v872
    %v1602 = vunpack.c.l.b16 %v873
    %v1603 = vunpack.c.h.b16 %v873
    %v1604 = vunpack.c.l.b16 %v874
    %v1605 = vunpack.c.h.b16 %v874
    %v1606 = vunpack.c.l.b16 %v875
    %v1607 = vunpack.c.h.b16 %v875
    %v1608 = vunpack.c.l.b16 %v876
    %v1609 = vunpack.c.h.b16 %v876
    %v1610 = vunpack.c.l.b16 %v877
    %v1611 = vunpack.c.h.b16 %v877
    %v1612 = vunpack.c.l.b16 %v878
    %v1613 = vunpack.c.h.b16 %v878
    %v1614 = vunpack.c.l.b16 %v879
    %v1615 = vunpack.c.h.b16 %v879
    %v1616 = vunpack.c.l.b16 %v880
    %v1617 = vunpack.c.h.b16 %v880
    %v1618 = vunpack.c.l.b16 %v881
    %v1619 = vunpack.c.h.b16 %v881
    %v1620 = vunpack.c.l.b16 %v882
    %v1621 = vunpack.c.h.b16 %v882
    %v1622 = vunpack.c.l.b16 %v883
    %v1623 = vunpack.c.h.b16 %v883
    %v1624 = vunpack.c.l.b16 %v884
    %v1625 = vunpack.c.h.b16 %v884
    %v1626 = vunpack.c.l.b16 %v885
    %v1627 = vunpack.c.h.b16 %v885
    %v1628 = vunpack.c.l.b16 %v886
    %v1629 = vunpack.c.h.b16 %v886
    %v1630 = vunpack.c.l.b16 %v887
    %v1631 = vunpack.c.h.b16 %v887
    %v1632 = vunpack.c.l.b16 %v888
    %v1633 = vunpack.c.h.b16 %v888
    %v1634 = vunpack.c.l.b16 %v889
    %v1635 = vunpack.c.h.b16 %v889
    %v1636 = vunpack.c.l.b16 %v890
    %v1637 = vunpack.c.h.b16 %v890
    %v1638 = vunpack.c.l.b16 %v891
    %v1639 = vunpack.c.h.b16 %v891
    %v1640 = vunpack.c.l.b16 %v892
    %v1641 = vunpack.c.h.b16 %v892
    %v1642 = vunpack.c.l.b16 %v893
    %v1643 = vunpack.c.h.b16 %v893
    %v1644 = vunpack.c.l.b16 %v894
    %v1645 = vunpack.c.h.b16 %v894
    %v1646 = vunpack.c.l.b16 %v895
    %v1647 = vunpack.c.h.b16 %v895
    %v1648 = vunpack.c.l.b16 %v896
    %v1649 = vunpack.c.h.b16 %v896
    %v1650 = vunpack.c.l.b16 %v897
    %v1651 = vunpack.c.h.b16 %v897
    %v1652 = vunpack.c.l.b16 %v898
    %v1653 = vunpack.c.h.b16 %v898
    %v1654 = vunpack.c.l.b16 %v899
    %v1655 = vunpack.c.h.b16 %v899
    %v1656 = vunpack.c.l.b16 %v900
    %v1657 = vunpack.c.h.b16 %v900
    %v1658 = vunpack.c.l.b16 %v901
    %v1659 = vunpack.c.h.b16 %v901
    %v1660 = vunpack.c.l.b16 %v902
    %v1661 = vunpack.c.h.b16 %v902
    %v1662 = vunpack.c.l.b16 %v903
    %v1663 = vunpack.c.h.b16 %v903
    %v1664 = vunpack.c.l.b16 %v904
    %v1665 = vunpack.c.h.b16 %v904
    %v1666 = vunpack.c.l.b16 %v905
    %v1667 = vunpack.c.h.b16 %v905
    %v1668 = vunpack.c.l.b16 %v906
    %v1669 = vunpack.c.h.b16 %v906
    %v1670 = vunpack.c.l.b16 %v907
    %v1671 = vunpack.c.h.b16 %v907
    %v1672 = vunpack.c.l.b16 %v908
    %v1673 = vunpack.c.h.b16 %v908
    %v1674 = vunpack.c.l.b16 %v909
    %v1675 = vunpack.c.h.b16 %v909
    %v1676 = vunpack.c.l.b16 %v910
    %v1677 = vunpack.c.h.b16 %v910
    %v1678 = vunpack.c.l.b16 %v911
    %v1679 = vunpack.c.h.b16 %v911
    %v1680 = vunpack.c.l.b16 %v912
    %v1681 = vunpack.c.h.b16 %v912
    %v1682 = vunpack.c.l.b16 %v913
    %v1683 = vunpack.c.h.b16 %v913
    %v1684 = vunpack.c.l.b16 %v914
    %v1685 = vunpack.c.h.b16 %v914
    %v1686 = vunpack.c.l.b16 %v915
    %v1687 = vunpack.c.h.b16 %v915
    %v1688 = vunpack.c.l.b16 %v916
    %v1689 = vunpack.c.h.b16 %v916
    %v1690 = vunpack.c.l.b16 %v917
    %v1691 = vunpack.c.h.b16 %v917
    %v1692 = vunpack.c.l.b16 %v918
    %v1693 = vunpack.c.h.b16 %v918
    %v1694 = vunpack.c.l.b16 %v919
    %v1695 = vunpack.c.h.b16 %v919
    %v1696 = vunpack.c.l.b16 %v920
    %v1697 = vunpack.c.h.b16 %v920
    %v1698 = vunpack.c.l.b16 %v921
    %v1699 = vunpack.c.h.b16 %v921
    %v1700 = vunpack.c.l.b16 %v922
    %v1701 = vunpack.c.h.b16 %v922
    %v1702 = vunpack.c.l.b16 %v923
    %v1703 = vunpack.c.h.b16 %v923
    %v1704 = vunpack.c.l.b16 %v924
    %v1705 = vunpack.c.h.b16 %v924
    %v1706 = vunpack.c.l.b16 %v925
    %v1707 = vunpack.c.h.b16 %v925
    %v1708 = vunpack.c.l.b16 %v926
    %v1709 = vunpack.c.h.b16 %v926
    %v1710 = vunpack.c.l.b16 %v927
    %v1711 = vunpack.c.h.b16 %v927
    %v1712 = vunpack.c.l.b16 %v928
    %v1713 = vunpack.c.h.b16 %v928
    %v1714 = vunpack.c.l.b16 %v929
    %v1715 = vunpack.c.h.b16 %v929
    %v1716 = vunpack.c.l.b16 %v930
    %v1717 = vunpack.c.h.b16 %v930
    %v1718 = vunpack.c.l.b16 %v931
    %v1719 = vunpack.c.h.b16 %v931
    %v1720 = vunpack.c.l.b16 %v932
    %v1721 = vunpack.c.h.b16 %v932
    %v1722 = vunpack.c.l.b16 %v933
    %v1723 = vunpack.c.h.b16 %v933
    %v1724 = vunpack.c.l.b16 %v934
    %v1725 = vunpack.c.h.b16 %v934
    %v1726 = vunpack.c.l.b16 %v935
    %v1727 = vunpack.c.h.b16 %v935
    %v1728 = vunpack.c.l.b16 %v936
    %v1729 = vunpack.c.h.b16 %v936
    %v1730 = vunpack.c.l.b16 %v937
    %v1731 = vunpack.c.h.b16 %v937
    %v1732 = vunpack.c.l.b16 %v938
    %v1733 = vunpack.c.h.b16 %v938
    %v1734 = vunpack.c.l.b16 %v939
    %v1735 = vunpack.c.h.b16 %v939
    %v1736 = vunpack.c.l.b16 %v940
    %v1737 = vunpack.c.h.b16 %v940
    %v1738 = vunpack.c.l.b16 %v941
    %v1739 = vunpack.c.h.b16 %v941
    %v1740 = vunpack.c.l.b16 %v942
    %v1741 = vunpack.c.h.b16 %v942
    %v1742 = vunpack.c.l.b16 %v943
    %v1743 = vunpack.c.h.b16 %v943
    %v1744 = vunpack.c.l.b16 %v944
    %v1745 = vunpack.c.h.b16 %v944
    %v1746 = vunpack.c.l.b16 %v945
    %v1747 = vunpack.c.h.b16 %v945
    %v1748 = vunpack.c.l.b16 %v946
    %v1749 = vunpack.c.h.b16 %v946
    %v1750 = vunpack.c.l.b16 %v947
    %v1751 = vunpack.c.h.b16 %v947
    %v1752 = vunpack.c.l.b16 %v948
    %v1753 = vunpack.c.h.b16 %v948
    %v1754 = vunpack.c.l.b16 %v949
    %v1755 = vunpack.c.h.b16 %v949
    %v1756 = vunpack.c.l.b16 %v950
    %v1757 = vunpack.c.h.b16 %v950
    %v1758 = vunpack.c.l.b16 %v951
    %v1759 = vunpack.c.h.b16 %v951
    %v1760 = vunpack.c.l.b16 %v952
    %v1761 = vunpack.c.h.b16 %v952
    %v1762 = vunpack.c.l.b16 %v953
    %v1763 = vunpack.c.h.b16 %v953
    %v1764 = vunpack.c.l.b16 %v954
    %v1765 = vunpack.c.h.b16 %v954
    %v1766 = vunpack.c.l.b16 %v955
    %v1767 = vunpack.c.h.b16 %v955
    %v1768 = vunpack.c.l.b16 %v956
    %v1769 = vunpack.c.h.b16 %v956
    %v1770 = vunpack.c.l.b16 %v957
    %v1771 = vunpack.c.h.b16 %v957
    %v1772 = vunpack.c.l.b16 %v958
    %v1773 = vunpack.c.h.b16 %v958
    %v1774 = vunpack.c.l.b16 %v959
    %v1775 = vunpack.c.h.b16 %v959
    %v1776 = vunpack.c.l.b16 %v960
    %v1777 = vunpack.c.h.b16 %v960
    %v1778 = vunpack.c.l.b16 %v961
    %v1779 = vunpack.c.h.b16 %v961
    %v1780 = vunpack.c.l.b16 %v962
    %v1781 = vunpack.c.h.b16 %v962
    %v1782 = vunpack.c.l.b16 %v963
    %v1783 = vunpack.c.h.b16 %v963
    %v1784 = vunpack.c.l.b16 %v964
    %v1785 = vunpack.c.h.b16 %v964
    %v1786 = vunpack.c.l.b16 %v965
    %v1787 = vunpack.c.h.b16 %v965
    %v1788 = vunpack.c.l.b16 %v966
    %v1789 = vunpack.c.h.b16 %v966
    %v1790 = vunpack.c.l.b16 %v967
    %v1791 = vunpack.c.h.b16 %v967
    %v1792 = vunpack.c.l.b16 %v968
    %v1793 = vunpack.c.h.b16 %v968
    %v1794 = vunpack.c.l.b16 %v969
    %v1795 = vunpack.c.h.b16 %v969
    %v1796 = vunpack.c.l.b16 %v970
    %v1797 = vunpack.c.h.b16 %v970
    %v1798 = vunpack.c.l.b16 %v971
    %v1799 = vunpack.c.h.b16 %v971
    %v1800 = vunpack.c.l.b16 %v972
    %v1801 = vunpack.c.h.b16 %v972
    %v1802 = vunpack.c.l.b16 %v973
    %v1803 = vunpack.c.h.b16 %v973
    %v1804 = vunpack.c.l.b16 %v974
    %v1805 = vunpack.c.h.b16 %v974
    %v1806 = vunpack.c.l.b16 %v975
    %v1807 = vunpack.c.h.b16 %v975
    %v1808 = vunpack.c.l.b16 %v976
    %v1809 = vunpack.c.h.b16 %v976
    %v1810 = vunpack.c.l.b16 %v977
    %v1811 = vunpack.c.h.b16 %v977
    %v1812 = vunpack.c.l.b16 %v978
    %v1813 = vunpack.c.h.b16 %v978
    %v1814 = vunpack.c.l.b16 %v979
    %v1815 = vunpack.c.h.b16 %v979
    %v1816 = vunpack.c.l.b16 %v980
    %v1817 = vunpack.c.h.b16 %v980
    %v1818 = vunpack.c.l.b16 %v981
    %v1819 = vunpack.c.h.b16 %v981
    %v1820 = vunpack.c.l.b16 %v982
    %v1821 = vunpack.c.h.b16 %v982
    %v1822 = vunpack.c.l.b16 %v983
    %v1823 = vunpack.c.h.b16 %v983
    %v1824 = vunpack.c.l.b16 %v984
    %v1825 = vunpack.c.h.b16 %v984
    %v1826 = vunpack.c.l.b16 %v985
    %v1827 = vunpack.c.h.b16 %v985
    %v1828 = vunpack.c.l.b16 %v986
    %v1829 = vunpack.c.h.b16 %v986
    %v1830 = vunpack.c.l.b16 %v987
    %v1831 = vunpack.c.h.b16 %v987
    %v1832 = vunpack.c.l.b16 %v988
    %v1833 = vunpack.c.h.b16 %v988
    %v1834 = vunpack.c.l.b16 %v989
    %v1835 = vunpack.c.h.b16 %v989
    %v1836 = vunpack.c.l.b16 %v990
    %v1837 = vunpack.c.h.b16 %v990
    %v1838 = vunpack.c.l.b16 %v991
    %v1839 = vunpack.c.h.b16 %v991
    %v1840 = vunpack.c.l.b16 %v992
    %v1841 = vunpack.c.h.b16 %v992
    %v1842 = vunpack.c.l.b16 %v993
    %v1843 = vunpack.c.h.b16 %v993
    %v1844 = vunpack.c.l.b16 %v994
    %v1845 = vunpack.c.h.b16 %v994
    %v1846 = vunpack.c.l.b16 %v995
    %v1847 = vunpack.c.h.b16 %v995
    %v1848 = vunpack.c.l.b16 %v996
    %v1849 = vunpack.c.h.b16 %v996
    %v1850 = vunpack.c.l.b16 %v997
    %v1851 = vunpack.c.h.b16 %v997
    %v1852 = vunpack.c.l.b16 %v998
    %v1853 = vunpack.c.h.b16 %v998
    %v1854 = vunpack.c.l.b16 %v999
    %v1855 = vunpack.c.h.b16 %v999
    %v1856 = vunpack.c.l.b16 %v1000
    %v1857 = vunpack.c.h.b16 %v1000
    %v1858 = vunpack.c.l.b16 %v1001
    %v1859 = vunpack.c.h.b16 %v1001
    %v1860 = vunpack.c.l.b16 %v1002
    %v1861 = vunpack.c.h.b16 %v1002
    %v1862 = vunpack.c.l.b16 %v1003
    %v1863 = vunpack.c.h.b16 %v1003
    %v1864 = vunpack.c.l.b16 %v1004
    %v1865 = vunpack.c.h.b16 %v1004
    %v1866 = vunpack.c.l.b16 %v1005
    %v1867 = vunpack.c.h.b16 %v1005
    %v1868 = vunpack.c.l.b16 %v1006
    %v1869 = vunpack.c.h.b16 %v1006
    %v1870 = vunpack.c.l.b16 %v1007
    %v1871 = vunpack.c.h.b16 %v1007
    %v1872 = vunpack.c.l.b16 %v1008
    %v1873 = vunpack.c.h.b16 %v1008
    %v1874 = vunpack.c.l.b16 %v1009
    %v1875 = vunpack.c.h.b16 %v1009
    %v1876 = vunpack.c.l.b16 %v1010
    %v1877 = vunpack.c.h.b16 %v1010
    %v1878 = vunpack.c.l.b16 %v1011
    %v1879 = vunpack.c.h.b16 %v1011
    %v1880 = vunpack.c.l.b16 %v1012
    %v1881 = vunpack.c.h.b16 %v1012
    %v1882 = vunpack.c.l.b16 %v1013
    %v1883 = vunpack.c.h.b16 %v1013
    %v1884 = vunpack.c.l.b16 %v1014
    %v1885 = vunpack.c.h.b16 %v1014
    %v1886 = vunpack.c.l.b16 %v1015
    %v1887 = vunpack.c.h.b16 %v1015
    %v1888 = vunpack.c.l.b16 %v1016
    %v1889 = vunpack.c.h.b16 %v1016
    %v1890 = vunpack.c.l.b16 %v1017
    %v1891 = vunpack.c.h.b16 %v1017
    %v1892 = vunpack.c.l.b16 %v1018
    %v1893 = vunpack.c.h.b16 %v1018
    %v1894 = vunpack.c.l.b16 %v1019
    %v1895 = vunpack.c.h.b16 %v1019
    %v1896 = vunpack.c.l.b16 %v1020
    %v1897 = vunpack.c.h.b16 %v1020
    %v1898 = vunpack.c.l.b16 %v1021
    %v1899 = vunpack.c.h.b16 %v1021
    %v1900 = vunpack.c.l.b16 %v1022
    %v1901 = vunpack.c.h.b16 %v1022
    %v1902 = vunpack.c.l.b16 %v1023
    %v1903 = vunpack.c.h.b16 %v1023
    %v1904 = vunpack.c.l.b16 %v1024
    %v1905 = vunpack.c.h.b16 %v1024
    %v1906 = vunpack.c.l.b16 %v1025
    %v1907 = vunpack.c.h.b16 %v1025
    %v1908 = vunpack.c.l.b16 %v1026
    %v1909 = vunpack.c.h.b16 %v1026
    %v1910 = vunpack.c.l.b16 %v1027
    %v1911 = vunpack.c.h.b16 %v1027
    %v1912 = vunpack.c.l.b16 %v1028
    %v1913 = vunpack.c.h.b16 %v1028
    %v1914 = vunpack.c.l.b16 %v1029
    %v1915 = vunpack.c.h.b16 %v1029
    %v1916 = vunpack.c.l.b16 %v1030
    %v1917 = vunpack.c.h.b16 %v1030
    %v1918 = vunpack.c.l.b16 %v1031
    %v1919 = vunpack.c.h.b16 %v1031
    %v1920 = vunpack.c.l.b16 %v1032
    %v1921 = vunpack.c.h.b16 %v1032
    %v1922 = vunpack.c.l.b16 %v1033
    %v1923 = vunpack.c.h.b16 %v1033
    %v1924 = vunpack.c.l.b16 %v1034
    %v1925 = vunpack.c.h.b16 %v1034
    %v1926 = vunpack.c.l.b16 %v1035
    %v1927 = vunpack.c.h.b16 %v1035
    %v1928 = vunpack.c.l.b16 %v1036
    %v1929 = vunpack.c.h.b16 %v1036
    %v1930 = vunpack.c.l.b16 %v1037
    %v1931 = vunpack.c.h.b16 %v1037
    %v1932 = vunpack.c.l.b16 %v1038
    %v1933 = vunpack.c.h.b16 %v1038
    %v1934 = vunpack.c.l.b16 %v1039
    %v1935 = vunpack.c.h.b16 %v1039
    %v1936 = vunpack.c.l.b16 %v1040
    %v1937 = vunpack.c.h.b16 %v1040
    %v1938 = vunpack.c.l.b16 %v1041
    %v1939 = vunpack.c.h.b16 %v1041
    %v1940 = vunpack.c.l.b16 %v1042
    %v1941 = vunpack.c.h.b16 %v1042
    %v1942 = vunpack.c.l.b16 %v1043
    %v1943 = vunpack.c.h.b16 %v1043
    %v1944 = vunpack.c.l.b16 %v1044
    %v1945 = vunpack.c.h.b16 %v1044
    %v1946 = vunpack.c.l.b16 %v1045
    %v1947 = vunpack.c.h.b16 %v1045
    %v1948 = vunpack.c.l.b16 %v1046
    %v1949 = vunpack.c.h.b16 %v1046
    %v1950 = vunpack.c.l.b16 %v1047
    %v1951 = vunpack.c.h.b16 %v1047
    %v1952 = vunpack.c.l.b16 %v1048
    %v1953 = vunpack.c.h.b16 %v1048
    %v1954 = vunpack.c.l.b16 %v1049
    %v1955 = vunpack.c.h.b16 %v1049
    %v1956 = vpack.c.b16 %v1388, %v1380
    %v1957 = vpack.c.b16 %v1389, %v1381
    %v1958 = vpack.c.b16 %v1390, %v1382
    %v1959 = vpack.c.b16 %v1391, %v1383
    %v1960 = vpack.c.b16 %v1392, %v1384
    %v1961 = vpack.c.b16 %v1393, %v1385
    %v1962 = vpack.c.b16 %v1394, %v1386
    %v1963 = vpack.c.b16 %v1395, %v1387
    %v1964 = vpack.c.b16 %v1404, %v1396
    %v1965 = vpack.c.b16 %v1405, %v1397
    %v1966 = vpack.c.b16 %v1406, %v1398
    %v1967 = vpack.c.b16 %v1407, %v1399
    %v1968 = vpack.c.b16 %v1408, %v1400
    %v1969 = vpack.c.b16 %v1409, %v1401
    %v1970 = vpack.c.b16 %v1410, %v1402
    %v1971 = vpack.c.b16 %v1411, %v1403
    %v1972 = vpack.c.b16 %v1420, %v1412
    %v1973 = vpack.c.b16 %v1421, %v1413
    %v1974 = vpack.c.b16 %v1422, %v1414
    %v1975 = vpack.c.b16 %v1423, %v1415
    %v1976 = vpack.c.b16 %v1424, %v1416
    %v1977 = vpack.c.b16 %v1425, %v1417
    %v1978 = vpack.c.b16 %v1426, %v1418
    %v1979 = vpack.c.b16 %v1427, %v1419
    %v1980 = vpack.c.b16 %v1436, %v1428
    %v1981 = vpack.c.b16 %v1437, %v1429
    %v1982 = vpack.c.b16 %v1438, %v1430
    %v1983 = vpack.c.b16 %v1439, %v1431
    %v1984 = vpack.c.b16 %v1440, %v1432
    %v1985 = vpack.c.b16 %v1441, %v1433
    %v1986 = vpack.c.b16 %v1442, %v1434
    %v1987 = vpack.c.b16 %v1443, %v1435
    %v1988 = vpack.c.b16 %v1452, %v1444
    %v1989 = vpack.c.b16 %v1453, %v1445
    %v1990 = vpack.c.b16 %v1454, %v1446
    %v1991 = vpack.c.b16 %v1455, %v1447
    %v1992 = vpack.c.b16 %v1456, %v1448
    %v1993 = vpack.c.b16 %v1457, %v1449
    %v1994 = vpack.c.b16 %v1458, %v1450
    %v1995 = vpack.c.b16 %v1459, %v1451
    %v1996 = vpack.c.b16 %v1468, %v1460
    %v1997 = vpack.c.b16 %v1469, %v1461
    %v1998 = vpack.c.b16 %v1470, %v1462
    %v1999 = vpack.c.b16 %v1471, %v1463
    %v2000 = vpack.c.b16 %v1472, %v1464
    %v2001 = vpack.c.b16 %v1473, %v1465
    %v2002 = vpack.c.b16 %v1474, %v1466
    %v2003 = vpack.c.b16 %v1475, %v1467
    %v2004 = vpack.c.b16 %v1484, %v1476
    %v2005 = vpack.c.b16 %v1485, %v1477
    %v2006 = vpack.c.b16 %v1486, %v1478
    %v2007 = vpack.c.b16 %v1487, %v1479
    %v2008 = vpack.c.b16 %v1488, %v1480
    %v2009 = vpack.c.b16 %v1489, %v1481
    %v2010 = vpack.c.b16 %v1490, %v1482
    %v2011 = vpack.c.b16 %v1491, %v1483
    %v2012 = vpack.c.b16 %v1500, %v1492
    %v2013 = vpack.c.b16 %v1501, %v1493
    %v2014 = vpack.c.b16 %v1502, %v1494
    %v2015 = vpack.c.b16 %v1503, %v1495
    %v2016 = vpack.c.b16 %v1504, %v1496
    %v2017 = vpack.c.b16 %v1505, %v1497
    %v2018 = vpack.c.b16 %v1506, %v1498
    %v2019 = vpack.c.b16 %v1507, %v1499
    %v2020 = vpack.c.b16 %v1516, %v1508
    %v2021 = vpack.c.b16 %v1517, %v1509
    %v2022 = vpack.c.b16 %v1518, %v1510
    %v2023 = vpack.c.b16 %v1519, %v1511
    %v2024 = vpack.c.b16 %v1520, %v1512
    %v2025 = vpack.c.b16 %v1521, %v1513
    %v2026 = vpack.c.b16 %v1522, %v1514
    %v2027 = vpack.c.b16 %v1523, %v1515
    %v2028 = vpack.c.b16 %v1532, %v1524
    %v2029 = vpack.c.b16 %v1533, %v1525
    %v2030 = vpack.c.b16 %v1534, %v1526
    %v2031 = vpack.c.b16 %v1535, %v1527
    %v2032 = vpack.c.b16 %v1536, %v1528
    %v2033 = vpack.c.b16 %v1537, %v1529
    %v2034 = vpack.c.b16 %v1538, %v1530
    %v2035 = vpack.c.b16 %v1539, %v1531
    %v2036 = vpack.c.b16 %v1548, %v1540
    %v2037 = vpack.c.b16 %v1549, %v1541
    %v2038 = vpack.c.b16 %v1550, %v1542
    %v2039 = vpack.c.b16 %v1551, %v1543
    %v2040 = vpack.c.b16 %v1552, %v1544
    %v2041 = vpack.c.b16 %v1553, %v1545
    %v2042 = vpack.c.b16 %v1554, %v1546
    %v2043 = vpack.c.b16 %v1555, %v1547
    %v2044 = vpack.c.b16 %v1564, %v1556
    %v2045 = vpack.c.b16 %v1565, %v1557
    %v2046 = vpack.c.b16 %v1566, %v1558
    %v2047 = vpack.c.b16 %v1567, %v1559
    %v2048 = vpack.c.b16 %v1568, %v1560
    %v2049 = vpack.c.b16 %v1569, %v1561
    %v2050 = vpack.c.b16 %v1570, %v1562
    %v2051 = vpack.c.b16 %v1571, %v1563
    %v2052 = vpack.c.b16 %v1580, %v1572
    %v2053 = vpack.c.b16 %v1581, %v1573
    %v2054 = vpack.c.b16 %v1582, %v1574
    %v2055 = vpack.c.b16 %v1583, %v1575
    %v2056 = vpack.c.b16 %v1584, %v1576
    %v2057 = vpack.c.b16 %v1585, %v1577
    %v2058 = vpack.c.b16 %v1586, %v1578
    %v2059 = vpack.c.b16 %v1587, %v1579
    %v2060 = vpack.c.b16 %v1596, %v1588
    %v2061 = vpack.c.b16 %v1597, %v1589
    %v2062 = vpack.c.b16 %v1598, %v1590
    %v2063 = vpack.c.b16 %v1599, %v1591
    %v2064 = vpack.c.b16 %v1600, %v1592
    %v2065 = vpack.c.b16 %v1601, %v1593
    %v2066 = vpack.c.b16 %v1602, %v1594
    %v2067 = vpack.c.b16 %v1603, %v1595
    %v2068 = vpack.c.b16 %v1612, %v1604
    %v2069 = vpack.c.b16 %v1613, %v1605
    %v2070 = vpack.c.b16 %v1614, %v1606
    %v2071 = vpack.c.b16 %v1615, %v1607
    %v2072 = vpack.c.b16 %v1616, %v1608
    %v2073 = vpack.c.b16 %v1617, %v1609
    %v2074 = vpack.c.b16 %v1618, %v1610
    %v2075 = vpack.c.b16 %v1619, %v1611
    %v2076 = vpack.c.b16 %v1628, %v1620
    %v2077 = vpack.c.b16 %v1629, %v1621
    %v2078 = vpack.c.b16 %v1630, %v1622
    %v2079 = vpack.c.b16 %v1631, %v1623
    %v2080 = vpack.c.b16 %v1632, %v1624
    %v2081 = vpack.c.b16 %v1633, %v1625
    %v2082 = vpack.c.b16 %v1634, %v1626
    %v2083 = vpack.c.b16 %v1635, %v1627
    %v2084 = vpack.c.b16 %v1644, %v1636
    %v2085 = vpack.c.b16 %v1645, %v1637
    %v2086 = vpack.c.b16 %v1646, %v1638
    %v2087 = vpack.c.b16 %v1647, %v1639
    %v2088 = vpack.c.b16 %v1648, %v1640
    %v2089 = vpack.c.b16 %v1649, %v1641
    %v2090 = vpack.c.b16 %v1650, %v1642
    %v2091 = vpack.c.b16 %v1651, %v1643
    %v2092 = vpack.c.b16 %v1660, %v1652
    %v2093 = vpack.c.b16 %v1661, %v1653
    %v2094 = vpack.c.b16 %v1662, %v1654
    %v2095 = vpack.c.b16 %v1663, %v1655
    %v2096 = vpack.c.b16 %v1664, %v1656
    %v2097 = vpack.c.b16 %v1665, %v1657
    %v2098 = vpack.c.b16 %v1666, %v1658
    %v2099 = vpack.c.b16 %v1667, %v1659
    %v2100 = vpack.c.b16 %v1676, %v1668
    %v2101 = vpack.c.b16 %v1677, %v1669
    %v2102 = vpack.c.b16 %v1678, %v1670
    %v2103 = vpack.c.b16 %v1679, %v1671
    %v2104 = vpack.c.b16 %v1680, %v1672
    %v2105 = vpack.c.b16 %v1681, %v1673
    %v2106 = vpack.c.b16 %v1682, %v1674
    %v2107 = vpack.c.b16 %v1683, %v1675
    %v2108 = vpack.c.b16 %v1692, %v1684
    %v2109 = vpack.c.b16 %v1693, %v1685
    %v2110 = vpack.c.b16 %v1694, %v1686
    %v2111 = vpack.c.b16 %v1695, %v1687
    %v2112 = vpack.c.b16 %v1696, %v1688
    %v2113 = vpack.c.b16 %v1697, %v1689
    %v2114 = vpack.c.b16 %v1698, %v1690
    %v2115 = vpack.c.b16 %v1699, %v1691
    %v2116 = vpack.c.b16 %v1708, %v1700
    %v2117 = vpack.c.b16 %v1709, %v1701
    %v2118 = vpack.c.b16 %v1710, %v1702
    %v2119 = vpack.c.b16 %v1711, %v1703
    %v2120 = vpack.c.b16 %v1712, %v1704
    %v2121 = vpack.c.b16 %v1713, %v1705
    %v2122 = vpack.c.b16 %v1714, %v1706
    %v2123 = vpack.c.b16 %v1715, %v1707
    %v2124 = vpack.c.b16 %v1724, %v1716
    %v2125 = vpack.c.b16 %v1725, %v1717
    %v2126 = vpack.c.b16 %v1726, %v1718
    %v2127 = vpack.c.b16 %v1727, %v1719
    %v2128 = vpack.c.b16 %v1728, %v1720
    %v2129 = vpack.c.b16 %v1729, %v1721
    %v2130 = vpack.c.b16 %v1730, %v1722
    %v2131 = vpack.c.b16 %v1731, %v1723
    %v2132 = vpack.c.b16 %v1740, %v1732
    %v2133 = vpack.c.b16 %v1741, %v1733
    %v2134 = vpack.c.b16 %v1742, %v1734
    %v2135 = vpack.c.b16 %v1743, %v1735
    %v2136 = vpack.c.b16 %v1744, %v1736
    %v2137 = vpack.c.b16 %v1745, %v1737
    %v2138 = vpack.c.b16 %v1746, %v1738
    %v2139 = vpack.c.b16 %v1747, %v1739
    %v2140 = vpack.c.b16 %v1756, %v1748
    %v2141 = vpack.c.b16 %v1757, %v1749
    %v2142 = vpack.c.b16 %v1758, %v1750
    %v2143 = vpack.c.b16 %v1759, %v1751
    %v2144 = vpack.c.b16 %v1760, %v1752
    %v2145 = vpack.c.b16 %v1761, %v1753
    %v2146 = vpack.c.b16 %v1762, %v1754
    %v2147 = vpack.c.b16 %v1763, %v1755
    %v2148 = vpack.c.b16 %v1772, %v1764
    %v2149 = vpack.c.b16 %v1773, %v1765
    %v2150 = vpack.c.b16 %v1774, %v1766
    %v2151 = vpack.c.b16 %v1775, %v1767
    %v2152 = vpack.c.b16 %v1776, %v1768
    %v2153 = vpack.c.b16 %v1777, %v1769
    %v2154 = vpack.c.b16 %v1778, %v1770
    %v2155 = vpack.c.b16 %v1779, %v1771
    %v2156 = vpack.c.b16 %v1788, %v1780
    %v2157 = vpack.c.b16 %v1789, %v1781
    %v2158 = vpack.c.b16 %v1790, %v1782
    %v2159 = vpack.c.b16 %v1791, %v1783
    %v2160 = vpack.c.b16 %v1792, %v1784
    %v2161 = vpack.c.b16 %v1793, %v1785
    %v2162 = vpack.c.b16 %v1794, %v1786
    %v2163 = vpack.c.b16 %v1795, %v1787
    %v2164 = vpack.c.b16 %v1804, %v1796
    %v2165 = vpack.c.b16 %v1805, %v1797
    %v2166 = vpack.c.b16 %v1806, %v1798
    %v2167 = vpack.c.b16 %v1807, %v1799
    %v2168 = vpack.c.b16 %v1808, %v1800
    %v2169 = vpack.c.b16 %v1809, %v1801
    %v2170 = vpack.c.b16 %v1810, %v1802
    %v2171 = vpack.c.b16 %v1811, %v1803
    %v2172 = vpack.c.b16 %v1820, %v1812
    %v2173 = vpack.c.b16 %v1821, %v1813
    %v2174 = vpack.c.b16 %v1822, %v1814
    %v2175 = vpack.c.b16 %v1823, %v1815
    %v2176 = vpack.c.b16 %v1824, %v1816
    %v2177 = vpack.c.b16 %v1825, %v1817
    %v2178 = vpack.c.b16 %v1826, %v1818
    %v2179 = vpack.c.b16 %v1827, %v1819
    %v2180 = vpack.c.b16 %v1836, %v1828
    %v2181 = vpack.c.b16 %v1837, %v1829
    %v2182 = vpack.c.b16 %v1838, %v1830
    %v2183 = vpack.c.b16 %v1839, %v1831
    %v2184 = vpack.c.b16 %v1840, %v1832
    %v2185 = vpack.c.b16 %v1841, %v1833
    %v2186 = vpack.c.b16 %v1842, %v1834
    %v2187 = vpack.c.b16 %v1843, %v1835
    %v2188 = vpack.c.b16 %v1852, %v1844
    %v2189 = vpack.c.b16 %v1853, %v1845
    %v2190 = vpack.c.b16 %v1854, %v1846
    %v2191 = vpack.c.b16 %v1855, %v1847
    %v2192 = vpack.c.b16 %v1856, %v1848
    %v2193 = vpack.c.b16 %v1857, %v1849
    %v2194 = vpack.c.b16 %v1858, %v1850
    %v2195 = vpack.c.b16 %v1859, %v1851
    %v2196 = vpack.c.b16 %v1868, %v1860
    %v2197 = vpack.c.b16 %v1869, %v1861
    %v2198 = vpack.c.b16 %v1870, %v1862
    %v2199 = vpack.c.b16 %v1871, %v1863
    %v2200 = vpack.c.b16 %v1872, %v1864
    %v2201 = vpack.c.b16 %v1873, %v1865
    %v2202 = vpack.c.b16 %v1874, %v1866
    %v2203 = vpack.c.b16 %v1875, %v1867
    %v2204 = vpack.c.b16 %v1884, %v1876
    %v2205 = vpack.c.b16 %v1885, %v1877
    %v2206 = vpack.c.b16 %v1886, %v1878
    %v2207 = vpack.c.b16 %v1887, %v1879
    %v2208 = vpack.c.b16 %v1888, %v1880
    %v2209 = vpack.c.b16 %v1889, %v1881
    %v2210 = vpack.c.b16 %v1890, %v1882
    %v2211 = vpack.c.b16 %v1891, %v1883
    %v2212 = vpack.c.b16 %v1900, %v1892
    %v2213 = vpack.c.b16 %v1901, %v1893
    %v2214 = vpack.c.b16 %v1902, %v1894
    %v2215 = vpack.c.b16 %v1903, %v1895
    %v2216 = vpack.c.b16 %v1904, %v1896
    %v2217 = vpack.c.b16 %v1905, %v1897
    %v2218 = vpack.c.b16 %v1906, %v1898
    %v2219 = vpack.c.b16 %v1907, %v1899
    %v2220 = vpack.c.b16 %v1916, %v1908
    %v2221 = vpack.c.b16 %v1917, %v1909
    %v2222 = vpack.c.b16 %v1918, %v1910
    %v2223 = vpack.c.b16 %v1919, %v1911
    %v2224 = vpack.c.b16 %v1920, %v1912
    %v2225 = vpack.c.b16 %v1921, %v1913
    %v2226 = vpack.c.b16 %v1922, %v1914
    %v2227 = vpack.c.b16 %v1923, %v1915
    %v2228 = vpack.c.b16 %v1932, %v1924
    %v2229 = vpack.c.b16 %v1933, %v1925
    %v2230 = vpack.c.b16 %v1934, %v1926
    %v2231 = vpack.c.b16 %v1935, %v1927
    %v2232 = vpack.c.b16 %v1936, %v1928
    %v2233 = vpack.c.b16 %v1937, %v1929
    %v2234 = vpack.c.b16 %v1938, %v1930
    %v2235 = vpack.c.b16 %v1939, %v1931
    %v2236 = vpack.c.b16 %v1948, %v1940
    %v2237 = vpack.c.b16 %v1949, %v1941
    %v2238 = vpack.c.b16 %v1950, %v1942
    %v2239 = vpack.c.b16 %v1951, %v1943
    %v2240 = vpack.c.b16 %v1952, %v1944
    %v2241 = vpack.c.b16 %v1953, %v1945
    %v2242 = vpack.c.b16 %v1954, %v1946
    %v2243 = vpack.c.b16 %v1955, %v1947
    %vm2532 = vcmask 523264
    %v2534 = vsel %vm2532, %v761, 0
    %2536 = vmatprep.subr.bf16.mxu0 %v1957
    %2537 = vmatpush1.bf16.msra.mxu0 %v1956
    %2538 = vmatprep.subr.bf16.mxu0 %v1965
    %2539 = vmatpush1.bf16.msra.mxu0 %v1964
    %2540 = vmatprep.subr.bf16.mxu0 %v1973
    %2541 = vmatpush1.bf16.msra.mxu0 %v1972
    %2542 = vmatprep.subr.bf16.mxu0 %v1981
    %2543 = vmatpush1.bf16.msra.mxu0 %v1980
    %2544 = vmatprep.subr.bf16.mxu0 %v1989
    %2545 = vmatpush1.bf16.msra.mxu0 %v1988
    %2546 = vmatprep.subr.bf16.mxu0 %v1997
    %2547 = vmatpush1.bf16.msra.mxu0 %v1996
    %2548 = vmatprep.subr.bf16.mxu0 %v2005
    %2549 = vmatpush1.bf16.msra.mxu0 %v2004
    %2550 = vmatprep.subr.bf16.mxu0 %v2013
    %2551 = vmatpush1.bf16.msra.mxu0 %v2012
    %2552 = vmatprep.subr.bf16.mxu0 %v2021
    %2553 = vmatpush1.bf16.msra.mxu0 %v2020
    %2554 = vmatprep.subr.bf16.mxu0 %v2029
    %2555 = vmatpush1.bf16.msra.mxu0 %v2028
    %2556 = vmatprep.subr.bf16.mxu0 %v2037
    %2557 = vmatpush1.bf16.msra.mxu0 %v2036
    %2558 = vmatprep.subr.bf16.mxu0 %v2045
    %2559 = vmatpush1.bf16.msra.mxu0 %v2044
    %2560 = vmatprep.subr.bf16.mxu0 %v2053
    %2561 = vmatpush1.bf16.msra.mxu0 %v2052
    %2562 = vmatprep.subr.bf16.mxu0 %v2061
    %2563 = vmatpush1.bf16.msra.mxu0 %v2060
    %2564 = vmatprep.subr.bf16.mxu0 %v2069
    %2565 = vmatpush1.bf16.msra.mxu0 %v2068
    %2566 = vmatprep.subr.bf16.mxu0 %v2077
    %2567 = vmatpush1.bf16.msra.mxu0 %v2076
    %2568 = vmatprep.mubr.bf16.mxu0 %v758
    %2569 = vmatmul.mubr.bf16.gmra.mrb[0].mxu0 %v757
    %v2570 = vpop.f32.mrb[0].mxu0
    %v2571 = vadd.f32 %v1055, %v2570
    %v2572 = vpop.f32.mrb[0].mxu0
    %v2573 = vadd.f32 %v1059, %v2572
    %v2574 = vpop.f32.mrb[0].mxu0
    %v2575 = vpop.f32.mrb[0].mxu0
    %2576 = vdwg.mxu0
    %2577 = vmatprep.subr.bf16.mxu0 %v2085
    %2578 = vmatpush1.bf16.msra.mxu0 %v2084
    %2579 = vmatprep.subr.bf16.mxu0 %v2093
    %2580 = vmatpush1.bf16.msra.mxu0 %v2092
    %2581 = vmatprep.subr.bf16.mxu0 %v2101
    %2582 = vmatpush1.bf16.msra.mxu0 %v2100
    %2583 = vmatprep.subr.bf16.mxu0 %v2109
    %2584 = vmatpush1.bf16.msra.mxu0 %v2108
    %2585 = vmatprep.subr.bf16.mxu0 %v2117
    %2586 = vmatpush1.bf16.msra.mxu0 %v2116
    %2587 = vmatprep.subr.bf16.mxu0 %v2125
    %2588 = vmatpush1.bf16.msra.mxu0 %v2124
    %2589 = vmatprep.subr.bf16.mxu0 %v2133
    %2590 = vmatpush1.bf16.msra.mxu0 %v2132
    %2591 = vmatprep.subr.bf16.mxu0 %v2141
    %2592 = vmatpush1.bf16.msra.mxu0 %v2140
    %2593 = vmatprep.subr.bf16.mxu0 %v2149
    %2594 = vmatpush1.bf16.msra.mxu0 %v2148
    %2595 = vmatprep.subr.bf16.mxu0 %v2157
    %2596 = vmatpush1.bf16.msra.mxu0 %v2156
    %2597 = vmatprep.subr.bf16.mxu0 %v2165
    %2598 = vmatpush1.bf16.msra.mxu0 %v2164
    %2599 = vmatprep.subr.bf16.mxu0 %v2173
    %2600 = vmatpush1.bf16.msra.mxu0 %v2172
    %2601 = vmatprep.subr.bf16.mxu0 %v2181
    %2602 = vmatpush1.bf16.msra.mxu0 %v2180
    %2603 = vmatprep.subr.bf16.mxu0 %v2189
    %2604 = vmatpush1.bf16.msra.mxu0 %v2188
    %2605 = vmatprep.subr.bf16.mxu0 %v2197
    %2606 = vmatpush1.bf16.msra.mxu0 %v2196
    %2607 = vmatprep.subr.bf16.mxu0 %v2205
    %2608 = vmatpush1.bf16.msra.mxu0 %v2204
    %2609 = vmatprep.mubr.bf16.mxu0 %v760
    %2610 = vmatmul.mubr.bf16.gmra.mrb[0].mxu0 %v759
    %v2611 = vpop.f32.mrb[0].mxu0
    %v2612 = vadd.f32 %v2571, %v2611
    %v2613 = vpop.f32.mrb[0].mxu0
    %v2614 = vadd.f32 %v2573, %v2613
    %v2615 = vpop.f32.mrb[0].mxu0
    %v2616 = vpop.f32.mrb[0].mxu0
    %2617 = vdwg.mxu0
    %2618 = vmatprep.subr.bf16.mxu0 %v2213
    %2619 = vmatpush1.bf16.msra.mxu0 %v2212
    %2620 = vmatprep.subr.bf16.mxu0 %v2221
    %2621 = vmatpush1.bf16.msra.mxu0 %v2220
    %2622 = vmatprep.subr.bf16.mxu0 %v2229
    %2623 = vmatpush1.bf16.msra.mxu0 %v2228
    %2624 = vmatprep.subr.bf16.mxu0 %v2237
    %2625 = vmatpush1.bf16.msra.mxu0 %v2236
    %2626 = vmatprep.subr.bf16.mxu0 0
    %2627 = vmatpush1.bf16.msra.mxu0 0
    %2628 = vmatprep.subr.bf16.mxu0 0
    %2629 = vmatpush1.bf16.msra.mxu0 0
    %2630 = vmatprep.subr.bf16.mxu0 0
    %2631 = vmatpush1.bf16.msra.mxu0 0
    %2632 = vmatprep.subr.bf16.mxu0 0
    %2633 = vmatpush1.bf16.msra.mxu0 0
    %2634 = vmatprep.subr.bf16.mxu0 0
    %2635 = vmatpush1.bf16.msra.mxu0 0
    %2636 = vmatprep.subr.bf16.mxu0 0
    %2637 = vmatpush1.bf16.msra.mxu0 0
    %2638 = vmatprep.subr.bf16.mxu0 0
    %2639 = vmatpush1.bf16.msra.mxu0 0
    %2640 = vmatprep.subr.bf16.mxu0 0
    %2641 = vmatpush1.bf16.msra.mxu0 0
    %2642 = vmatprep.subr.bf16.mxu0 0
    %2643 = vmatpush1.bf16.msra.mxu0 0
    %2644 = vmatprep.subr.bf16.mxu0 0
    %2645 = vmatpush1.bf16.msra.mxu0 0
    %2646 = vmatprep.subr.bf16.mxu0 0
    %2647 = vmatpush1.bf16.msra.mxu0 0
    %2648 = vmatprep.subr.bf16.mxu0 0
    %2649 = vmatpush1.bf16.msra.mxu0 0
    %2650 = vmatprep.mubr.bf16.mxu0 0
    %2651 = vmatmul.mubr.bf16.gmra.mrb[0].mxu0 %v2534
    %v2652 = vpop.f32.mrb[0].mxu0
    %v2653 = vadd.f32 %v2612, %v2652
    %v2654 = vpop.f32.mrb[0].mxu0
    %v2655 = vadd.f32 %v2614, %v2654
    %v2656 = vpop.f32.mrb[0].mxu0
    %v2657 = vpop.f32.mrb[0].mxu0
    %2658 = vdwg.mxu0
    %2659 = vmatprep.subr.bf16.mxu0 %v1959
    %2660 = vmatpush1.bf16.msra.mxu0 %v1958
    %2661 = vmatprep.subr.bf16.mxu0 %v1967
    %2662 = vmatpush1.bf16.msra.mxu0 %v1966
    %2663 = vmatprep.subr.bf16.mxu0 %v1975
    %2664 = vmatpush1.bf16.msra.mxu0 %v1974
    %2665 = vmatprep.subr.bf16.mxu0 %v1983
    %2666 = vmatpush1.bf16.msra.mxu0 %v1982
    %2667 = vmatprep.subr.bf16.mxu0 %v1991
    %2668 = vmatpush1.bf16.msra.mxu0 %v1990
    %2669 = vmatprep.subr.bf16.mxu0 %v1999
    %2670 = vmatpush1.bf16.msra.mxu0 %v1998
    %2671 = vmatprep.subr.bf16.mxu0 %v2007
    %2672 = vmatpush1.bf16.msra.mxu0 %v2006
    %2673 = vmatprep.subr.bf16.mxu0 %v2015
    %2674 = vmatpush1.bf16.msra.mxu0 %v2014
    %2675 = vmatprep.subr.bf16.mxu0 %v2023
    %2676 = vmatpush1.bf16.msra.mxu0 %v2022
    %2677 = vmatprep.subr.bf16.mxu0 %v2031
    %2678 = vmatpush1.bf16.msra.mxu0 %v2030
    %2679 = vmatprep.subr.bf16.mxu0 %v2039
    %2680 = vmatpush1.bf16.msra.mxu0 %v2038
    %2681 = vmatprep.subr.bf16.mxu0 %v2047
    %2682 = vmatpush1.bf16.msra.mxu0 %v2046
    %2683 = vmatprep.subr.bf16.mxu0 %v2055
    %2684 = vmatpush1.bf16.msra.mxu0 %v2054
    %2685 = vmatprep.subr.bf16.mxu0 %v2063
    %2686 = vmatpush1.bf16.msra.mxu0 %v2062
    %2687 = vmatprep.subr.bf16.mxu0 %v2071
    %2688 = vmatpush1.bf16.msra.mxu0 %v2070
    %2689 = vmatprep.subr.bf16.mxu0 %v2079
    %2690 = vmatpush1.bf16.msra.mxu0 %v2078
    %2691 = vmatprep.mubr.bf16.mxu0 %v758
    %2692 = vmatmul.mubr.bf16.gmra.mrb[0].mxu0 %v757
    %v2693 = vpop.f32.mrb[0].mxu0
    %v2694 = vadd.f32 %v1063, %v2693
    %v2695 = vpop.f32.mrb[0].mxu0
    %v2696 = vadd.f32 %v1067, %v2695
    %v2697 = vpop.f32.mrb[0].mxu0
    %v2698 = vpop.f32.mrb[0].mxu0
    %2699 = vdwg.mxu0
    %2700 = vmatprep.subr.bf16.mxu0 %v2087
    %2701 = vmatpush1.bf16.msra.mxu0 %v2086
    %2702 = vmatprep.subr.bf16.mxu0 %v2095
    %2703 = vmatpush1.bf16.msra.mxu0 %v2094
    %2704 = vmatprep.subr.bf16.mxu0 %v2103
    %2705 = vmatpush1.bf16.msra.mxu0 %v2102
    %2706 = vmatprep.subr.bf16.mxu0 %v2111
    %2707 = vmatpush1.bf16.msra.mxu0 %v2110
    %2708 = vmatprep.subr.bf16.mxu0 %v2119
    %2709 = vmatpush1.bf16.msra.mxu0 %v2118
    %2710 = vmatprep.subr.bf16.mxu0 %v2127
    %2711 = vmatpush1.bf16.msra.mxu0 %v2126
    %2712 = vmatprep.subr.bf16.mxu0 %v2135
    %2713 = vmatpush1.bf16.msra.mxu0 %v2134
    %2714 = vmatprep.subr.bf16.mxu0 %v2143
    %2715 = vmatpush1.bf16.msra.mxu0 %v2142
    %2716 = vmatprep.subr.bf16.mxu0 %v2151
    %2717 = vmatpush1.bf16.msra.mxu0 %v2150
    %2718 = vmatprep.subr.bf16.mxu0 %v2159
    %2719 = vmatpush1.bf16.msra.mxu0 %v2158
    %2720 = vmatprep.subr.bf16.mxu0 %v2167
    %2721 = vmatpush1.bf16.msra.mxu0 %v2166
    %2722 = vmatprep.subr.bf16.mxu0 %v2175
    %2723 = vmatpush1.bf16.msra.mxu0 %v2174
    %2724 = vmatprep.subr.bf16.mxu0 %v2183
    %2725 = vmatpush1.bf16.msra.mxu0 %v2182
    %2726 = vmatprep.subr.bf16.mxu0 %v2191
    %2727 = vmatpush1.bf16.msra.mxu0 %v2190
    %2728 = vmatprep.subr.bf16.mxu0 %v2199
    %2729 = vmatpush1.bf16.msra.mxu0 %v2198
    %2730 = vmatprep.subr.bf16.mxu0 %v2207
    %2731 = vmatpush1.bf16.msra.mxu0 %v2206
    %2732 = vmatprep.mubr.bf16.mxu0 %v760
    %2733 = vmatmul.mubr.bf16.gmra.mrb[0].mxu0 %v759
    %v2734 = vpop.f32.mrb[0].mxu0
    %v2735 = vadd.f32 %v2694, %v2734
    %v2736 = vpop.f32.mrb[0].mxu0
    %v2737 = vadd.f32 %v2696, %v2736
    %v2738 = vpop.f32.mrb[0].mxu0
    %v2739 = vpop.f32.mrb[0].mxu0
    %2740 = vdwg.mxu0
    %2741 = vmatprep.subr.bf16.mxu0 %v2215
    %2742 = vmatpush1.bf16.msra.mxu0 %v2214
    %2743 = vmatprep.subr.bf16.mxu0 %v2223
    %2744 = vmatpush1.bf16.msra.mxu0 %v2222
    %2745 = vmatprep.subr.bf16.mxu0 %v2231
    %2746 = vmatpush1.bf16.msra.mxu0 %v2230
    %2747 = vmatprep.subr.bf16.mxu0 %v2239
    %2748 = vmatpush1.bf16.msra.mxu0 %v2238
    %2749 = vmatprep.subr.bf16.mxu0 0
    %2750 = vmatpush1.bf16.msra.mxu0 0
    %2751 = vmatprep.subr.bf16.mxu0 0
    %2752 = vmatpush1.bf16.msra.mxu0 0
    %2753 = vmatprep.subr.bf16.mxu0 0
    %2754 = vmatpush1.bf16.msra.mxu0 0
    %2755 = vmatprep.subr.bf16.mxu0 0
    %2756 = vmatpush1.bf16.msra.mxu0 0
    %2757 = vmatprep.subr.bf16.mxu0 0
    %2758 = vmatpush1.bf16.msra.mxu0 0
    %2759 = vmatprep.subr.bf16.mxu0 0
    %2760 = vmatpush1.bf16.msra.mxu0 0
    %2761 = vmatprep.subr.bf16.mxu0 0
    %2762 = vmatpush1.bf16.msra.mxu0 0
    %2763 = vmatprep.subr.bf16.mxu0 0
    %2764 = vmatpush1.bf16.msra.mxu0 0
    %2765 = vmatprep.subr.bf16.mxu0 0
    %2766 = vmatpush1.bf16.msra.mxu0 0
    %2767 = vmatprep.subr.bf16.mxu0 0
    %2768 = vmatpush1.bf16.msra.mxu0 0
    %2769 = vmatprep.subr.bf16.mxu0 0
    %2770 = vmatpush1.bf16.msra.mxu0 0
    %2771 = vmatprep.subr.bf16.mxu0 0
    %2772 = vmatpush1.bf16.msra.mxu0 0
    %2773 = vmatprep.mubr.bf16.mxu0 0
    %2774 = vmatmul.mubr.bf16.gmra.mrb[0].mxu0 %v2534
    %v2775 = vpop.f32.mrb[0].mxu0
    %v2776 = vadd.f32 %v2735, %v2775
    %v2777 = vpop.f32.mrb[0].mxu0
    %v2778 = vadd.f32 %v2737, %v2777
    %v2779 = vpop.f32.mrb[0].mxu0
    %v2780 = vpop.f32.mrb[0].mxu0
    %2781 = vdwg.mxu0
    %2782 = vmatprep.subr.bf16.mxu0 %v1961
    %2783 = vmatpush1.bf16.msra.mxu0 %v1960
    %2784 = vmatprep.subr.bf16.mxu0 %v1969
    %2785 = vmatpush1.bf16.msra.mxu0 %v1968
    %2786 = vmatprep.subr.bf16.mxu0 %v1977
    %2787 = vmatpush1.bf16.msra.mxu0 %v1976
    %2788 = vmatprep.subr.bf16.mxu0 %v1985
    %2789 = vmatpush1.bf16.msra.mxu0 %v1984
    %2790 = vmatprep.subr.bf16.mxu0 %v1993
    %2791 = vmatpush1.bf16.msra.mxu0 %v1992
    %2792 = vmatprep.subr.bf16.mxu0 %v2001
    %2793 = vmatpush1.bf16.msra.mxu0 %v2000
    %2794 = vmatprep.subr.bf16.mxu0 %v2009
    %2795 = vmatpush1.bf16.msra.mxu0 %v2008
    %2796 = vmatprep.subr.bf16.mxu0 %v2017
    %2797 = vmatpush1.bf16.msra.mxu0 %v2016
    %2798 = vmatprep.subr.bf16.mxu0 %v2025
    %2799 = vmatpush1.bf16.msra.mxu0 %v2024
    %2800 = vmatprep.subr.bf16.mxu0 %v2033
    %2801 = vmatpush1.bf16.msra.mxu0 %v2032
    %2802 = vmatprep.subr.bf16.mxu0 %v2041
    %2803 = vmatpush1.bf16.msra.mxu0 %v2040
    %2804 = vmatprep.subr.bf16.mxu0 %v2049
    %2805 = vmatpush1.bf16.msra.mxu0 %v2048
    %2806 = vmatprep.subr.bf16.mxu0 %v2057
    %2807 = vmatpush1.bf16.msra.mxu0 %v2056
    %2808 = vmatprep.subr.bf16.mxu0 %v2065
    %2809 = vmatpush1.bf16.msra.mxu0 %v2064
    %2810 = vmatprep.subr.bf16.mxu0 %v2073
    %2811 = vmatpush1.bf16.msra.mxu0 %v2072
    %2812 = vmatprep.subr.bf16.mxu0 %v2081
    %2813 = vmatpush1.bf16.msra.mxu0 %v2080
    %2814 = vmatprep.mubr.bf16.mxu0 %v758
    %2815 = vmatmul.mubr.bf16.gmra.mrb[0].mxu0 %v757
    %v2816 = vpop.f32.mrb[0].mxu0
    %v2817 = vadd.f32 %v1071, %v2816
    %v2818 = vpop.f32.mrb[0].mxu0
    %v2819 = vadd.f32 %v1075, %v2818
    %v2820 = vpop.f32.mrb[0].mxu0
    %v2821 = vpop.f32.mrb[0].mxu0
    %2822 = vdwg.mxu0
    %2823 = vmatprep.subr.bf16.mxu0 %v2089
    %2824 = vmatpush1.bf16.msra.mxu0 %v2088
    %2825 = vmatprep.subr.bf16.mxu0 %v2097
    %2826 = vmatpush1.bf16.msra.mxu0 %v2096
    %2827 = vmatprep.subr.bf16.mxu0 %v2105
    %2828 = vmatpush1.bf16.msra.mxu0 %v2104
    %2829 = vmatprep.subr.bf16.mxu0 %v2113
    %2830 = vmatpush1.bf16.msra.mxu0 %v2112
    %2831 = vmatprep.subr.bf16.mxu0 %v2121
    %2832 = vmatpush1.bf16.msra.mxu0 %v2120
    %2833 = vmatprep.subr.bf16.mxu0 %v2129
    %2834 = vmatpush1.bf16.msra.mxu0 %v2128
    %2835 = vmatprep.subr.bf16.mxu0 %v2137
    %2836 = vmatpush1.bf16.msra.mxu0 %v2136
    %2837 = vmatprep.subr.bf16.mxu0 %v2145
    %2838 = vmatpush1.bf16.msra.mxu0 %v2144
    %2839 = vmatprep.subr.bf16.mxu0 %v2153
    %2840 = vmatpush1.bf16.msra.mxu0 %v2152
    %2841 = vmatprep.subr.bf16.mxu0 %v2161
    %2842 = vmatpush1.bf16.msra.mxu0 %v2160
    %2843 = vmatprep.subr.bf16.mxu0 %v2169
    %2844 = vmatpush1.bf16.msra.mxu0 %v2168
    %2845 = vmatprep.subr.bf16.mxu0 %v2177
    %2846 = vmatpush1.bf16.msra.mxu0 %v2176
    %2847 = vmatprep.subr.bf16.mxu0 %v2185
    %2848 = vmatpush1.bf16.msra.mxu0 %v2184
    %2849 = vmatprep.subr.bf16.mxu0 %v2193
    %2850 = vmatpush1.bf16.msra.mxu0 %v2192
    %2851 = vmatprep.subr.bf16.mxu0 %v2201
    %2852 = vmatpush1.bf16.msra.mxu0 %v2200
    %2853 = vmatprep.subr.bf16.mxu0 %v2209
    %2854 = vmatpush1.bf16.msra.mxu0 %v2208
    %2855 = vmatprep.mubr.bf16.mxu0 %v760
    %2856 = vmatmul.mubr.bf16.gmra.mrb[0].mxu0 %v759
    %v2857 = vpop.f32.mrb[0].mxu0
    %v2858 = vadd.f32 %v2817, %v2857
    %v2859 = vpop.f32.mrb[0].mxu0
    %v2860 = vadd.f32 %v2819, %v2859
    %v2861 = vpop.f32.mrb[0].mxu0
    %v2862 = vpop.f32.mrb[0].mxu0
    %2863 = vdwg.mxu0
    %2864 = vmatprep.subr.bf16.mxu0 %v2217
    %2865 = vmatpush1.bf16.msra.mxu0 %v2216
    %2866 = vmatprep.subr.bf16.mxu0 %v2225
    %2867 = vmatpush1.bf16.msra.mxu0 %v2224
    %2868 = vmatprep.subr.bf16.mxu0 %v2233
    %2869 = vmatpush1.bf16.msra.mxu0 %v2232
    %2870 = vmatprep.subr.bf16.mxu0 %v2241
    %2871 = vmatpush1.bf16.msra.mxu0 %v2240
    %2872 = vmatprep.subr.bf16.mxu0 0
    %2873 = vmatpush1.bf16.msra.mxu0 0
    %2874 = vmatprep.subr.bf16.mxu0 0
    %2875 = vmatpush1.bf16.msra.mxu0 0
    %2876 = vmatprep.subr.bf16.mxu0 0
    %2877 = vmatpush1.bf16.msra.mxu0 0
    %2878 = vmatprep.subr.bf16.mxu0 0
    %2879 = vmatpush1.bf16.msra.mxu0 0
    %2880 = vmatprep.subr.bf16.mxu0 0
    %2881 = vmatpush1.bf16.msra.mxu0 0
    %2882 = vmatprep.subr.bf16.mxu0 0
    %2883 = vmatpush1.bf16.msra.mxu0 0
    %2884 = vmatprep.subr.bf16.mxu0 0
    %2885 = vmatpush1.bf16.msra.mxu0 0
    %2886 = vmatprep.subr.bf16.mxu0 0
    %2887 = vmatpush1.bf16.msra.mxu0 0
    %2888 = vmatprep.subr.bf16.mxu0 0
    %2889 = vmatpush1.bf16.msra.mxu0 0
    %2890 = vmatprep.subr.bf16.mxu0 0
    %2891 = vmatpush1.bf16.msra.mxu0 0
    %2892 = vmatprep.subr.bf16.mxu0 0
    %2893 = vmatpush1.bf16.msra.mxu0 0
    %2894 = vmatprep.subr.bf16.mxu0 0
    %2895 = vmatpush1.bf16.msra.mxu0 0
    %2896 = vmatprep.mubr.bf16.mxu0 0
    %2897 = vmatmul.mubr.bf16.gmra.mrb[0].mxu0 %v2534
    %v2898 = vpop.f32.mrb[0].mxu0
    %v2899 = vadd.f32 %v2858, %v2898
    %v2900 = vpop.f32.mrb[0].mxu0
    %v2901 = vadd.f32 %v2860, %v2900
    %v2902 = vpop.f32.mrb[0].mxu0
    %v2903 = vpop.f32.mrb[0].mxu0
    %2904 = vdwg.mxu0
    %2905 = vmatprep.subr.bf16.mxu0 %v1963
    %2906 = vmatpush1.bf16.msra.mxu0 %v1962
    %2907 = vmatprep.subr.bf16.mxu0 %v1971
    %2908 = vmatpush1.bf16.msra.mxu0 %v1970
    %2909 = vmatprep.subr.bf16.mxu0 %v1979
    %2910 = vmatpush1.bf16.msra.mxu0 %v1978
    %2911 = vmatprep.subr.bf16.mxu0 %v1987
    %2912 = vmatpush1.bf16.msra.mxu0 %v1986
    %2913 = vmatprep.subr.bf16.mxu0 %v1995
    %2914 = vmatpush1.bf16.msra.mxu0 %v1994
    %2915 = vmatprep.subr.bf16.mxu0 %v2003
    %2916 = vmatpush1.bf16.msra.mxu0 %v2002
    %2917 = vmatprep.subr.bf16.mxu0 %v2011
    %2918 = vmatpush1.bf16.msra.mxu0 %v2010
    %2919 = vmatprep.subr.bf16.mxu0 %v2019
    %2920 = vmatpush1.bf16.msra.mxu0 %v2018
    %2921 = vmatprep.subr.bf16.mxu0 %v2027
    %2922 = vmatpush1.bf16.msra.mxu0 %v2026
    %2923 = vmatprep.subr.bf16.mxu0 %v2035
    %2924 = vmatpush1.bf16.msra.mxu0 %v2034
    %2925 = vmatprep.subr.bf16.mxu0 %v2043
    %2926 = vmatpush1.bf16.msra.mxu0 %v2042
    %2927 = vmatprep.subr.bf16.mxu0 %v2051
    %2928 = vmatpush1.bf16.msra.mxu0 %v2050
    %2929 = vmatprep.subr.bf16.mxu0 %v2059
    %2930 = vmatpush1.bf16.msra.mxu0 %v2058
    %2931 = vmatprep.subr.bf16.mxu0 %v2067
    %2932 = vmatpush1.bf16.msra.mxu0 %v2066
    %2933 = vmatprep.subr.bf16.mxu0 %v2075
    %2934 = vmatpush1.bf16.msra.mxu0 %v2074
    %2935 = vmatprep.subr.bf16.mxu0 %v2083
    %2936 = vmatpush1.bf16.msra.mxu0 %v2082
    %2937 = vmatprep.mubr.bf16.mxu0 %v758
    %2938 = vmatmul.mubr.bf16.gmra.mrb[0].mxu0 %v757
    %v2939 = vpop.f32.mrb[0].mxu0
    %v2940 = vadd.f32 %v1079, %v2939
    %v2941 = vpop.f32.mrb[0].mxu0
    %v2942 = vadd.f32 %v1083, %v2941
    %v2943 = vpop.f32.mrb[0].mxu0
    %v2944 = vpop.f32.mrb[0].mxu0
    %2945 = vdwg.mxu0
    %2946 = vmatprep.subr.bf16.mxu0 %v2091
    %2947 = vmatpush1.bf16.msra.mxu0 %v2090
    %2948 = vmatprep.subr.bf16.mxu0 %v2099
    %2949 = vmatpush1.bf16.msra.mxu0 %v2098
    %2950 = vmatprep.subr.bf16.mxu0 %v2107
    %2951 = vmatpush1.bf16.msra.mxu0 %v2106
    %2952 = vmatprep.subr.bf16.mxu0 %v2115
    %2953 = vmatpush1.bf16.msra.mxu0 %v2114
    %2954 = vmatprep.subr.bf16.mxu0 %v2123
    %2955 = vmatpush1.bf16.msra.mxu0 %v2122
    %2956 = vmatprep.subr.bf16.mxu0 %v2131
    %2957 = vmatpush1.bf16.msra.mxu0 %v2130
    %2958 = vmatprep.subr.bf16.mxu0 %v2139
    %2959 = vmatpush1.bf16.msra.mxu0 %v2138
    %2960 = vmatprep.subr.bf16.mxu0 %v2147
    %2961 = vmatpush1.bf16.msra.mxu0 %v2146
    %2962 = vmatprep.subr.bf16.mxu0 %v2155
    %2963 = vmatpush1.bf16.msra.mxu0 %v2154
    %2964 = vmatprep.subr.bf16.mxu0 %v2163
    %2965 = vmatpush1.bf16.msra.mxu0 %v2162
    %2966 = vmatprep.subr.bf16.mxu0 %v2171
    %2967 = vmatpush1.bf16.msra.mxu0 %v2170
    %2968 = vmatprep.subr.bf16.mxu0 %v2179
    %2969 = vmatpush1.bf16.msra.mxu0 %v2178
    %2970 = vmatprep.subr.bf16.mxu0 %v2187
    %2971 = vmatpush1.bf16.msra.mxu0 %v2186
    %2972 = vmatprep.subr.bf16.mxu0 %v2195
    %2973 = vmatpush1.bf16.msra.mxu0 %v2194
    %2974 = vmatprep.subr.bf16.mxu0 %v2203
    %2975 = vmatpush1.bf16.msra.mxu0 %v2202
    %2976 = vmatprep.subr.bf16.mxu0 %v2211
    %2977 = vmatpush1.bf16.msra.mxu0 %v2210
    %2978 = vmatprep.mubr.bf16.mxu0 %v760
    %2979 = vmatmul.mubr.bf16.gmra.mrb[0].mxu0 %v759
    %v2980 = vpop.f32.mrb[0].mxu0
    %v2981 = vadd.f32 %v2940, %v2980
    %v2982 = vpop.f32.mrb[0].mxu0
    %v2983 = vadd.f32 %v2942, %v2982
    %v2984 = vpop.f32.mrb[0].mxu0
    %v2985 = vpop.f32.mrb[0].mxu0
    %2986 = vdwg.mxu0
    %2987 = vmatprep.subr.bf16.mxu0 %v2219
    %2988 = vmatpush1.bf16.msra.mxu0 %v2218
    %2989 = vmatprep.subr.bf16.mxu0 %v2227
    %2990 = vmatpush1.bf16.msra.mxu0 %v2226
    %2991 = vmatprep.subr.bf16.mxu0 %v2235
    %2992 = vmatpush1.bf16.msra.mxu0 %v2234
    %2993 = vmatprep.subr.bf16.mxu0 %v2243
    %2994 = vmatpush1.bf16.msra.mxu0 %v2242
    %2995 = vmatprep.subr.bf16.mxu0 0
    %2996 = vmatpush1.bf16.msra.mxu0 0
    %2997 = vmatprep.subr.bf16.mxu0 0
    %2998 = vmatpush1.bf16.msra.mxu0 0
    %2999 = vmatprep.subr.bf16.mxu0 0
    %3000 = vmatpush1.bf16.msra.mxu0 0
    %3001 = vmatprep.subr.bf16.mxu0 0
    %3002 = vmatpush1.bf16.msra.mxu0 0
    %3003 = vmatprep.subr.bf16.mxu0 0
    %3004 = vmatpush1.bf16.msra.mxu0 0
    %3005 = vmatprep.subr.bf16.mxu0 0
    %3006 = vmatpush1.bf16.msra.mxu0 0
    %3007 = vmatprep.subr.bf16.mxu0 0
    %3008 = vmatpush1.bf16.msra.mxu0 0
    %3009 = vmatprep.subr.bf16.mxu0 0
    %3010 = vmatpush1.bf16.msra.mxu0 0
    %3011 = vmatprep.subr.bf16.mxu0 0
    %3012 = vmatpush1.bf16.msra.mxu0 0
    %3013 = vmatprep.subr.bf16.mxu0 0
    %3014 = vmatpush1.bf16.msra.mxu0 0
    %3015 = vmatprep.subr.bf16.mxu0 0
    %3016 = vmatpush1.bf16.msra.mxu0 0
    %3017 = vmatprep.subr.bf16.mxu0 0
    %3018 = vmatpush1.bf16.msra.mxu0 0
    %3019 = vmatprep.mubr.bf16.mxu0 0
    %3020 = vmatmul.mubr.bf16.gmra.mrb[0].mxu0 %v2534
    %v3021 = vpop.f32.mrb[0].mxu0
    %v3022 = vadd.f32 %v2981, %v3021
    %v3023 = vpop.f32.mrb[0].mxu0
    %v3024 = vadd.f32 %v2983, %v3023
    %v3025 = vpop.f32.mrb[0].mxu0
    %v3026 = vpop.f32.mrb[0].mxu0
    %3027 = vdwg.mxu0
    %v3036 = vcombine.low %v2653, %v2655
    %v3037 = vcombine.low %v2776, %v2778
    %v3039 = vunpack.c.l.s4 1983009808
    %v3040 = vunpack.c.0.s8 %v3039
    %v3041 = vlaneseq
    %v3042 = vshrl.u32 %v3041, 7
    %v3043 = vsub.s32 %v3040, %v3042
    %v3044 = vrot.slane %v3036, %v3043
    %v3046 = vunpack.c.l.s4 1983009808
    %v3047 = vunpack.c.0.s8 %v3046
    %v3048 = vlaneseq
    %v3049 = vshrl.u32 %v3048, 7
    %v3050 = vsub.s32 %v3047, %v3049
    %v3051 = vrot.slane %v3037, %v3050
    %v3052 = vcombine.low %v3044, %v3051
    %v3053 = vcombine.low %v2899, %v2901
    %v3054 = vcombine.low %v3022, %v3024
    %v3056 = vunpack.c.l.s4 1983009808
    %v3057 = vunpack.c.0.s8 %v3056
    %v3058 = vlaneseq
    %v3059 = vshrl.u32 %v3058, 7
    %v3060 = vsub.s32 %v3057, %v3059
    %v3061 = vrot.slane %v3053, %v3060
    %v3063 = vunpack.c.l.s4 1983009808
    %v3064 = vunpack.c.0.s8 %v3063
    %v3065 = vlaneseq
    %v3066 = vshrl.u32 %v3065, 7
    %v3067 = vsub.s32 %v3064, %v3066
    %v3068 = vrot.slane %v3054, %v3067
    %v3069 = vcombine.low %v3061, %v3068
    %3072 = vst [vmem:[#allocation8] sm:$0xff] %v3052
    %vm3073 = vcmask 1043458
    %vm3074 = vmor %vm3073, %vm612
    %vm3075 = vcmask 1045508
    %vm3076 = vmor %vm3075, %vm3074
    %vm3077 = vcmask 850950
    %vm3078 = vmor %vm3077, %vm3076
    %3079 = vst.msk [vmem:[#allocation8 + $0x8] sm:$0xff] %vm3078, %v3069
    // Predicated region
    $region34: #{super_resolution_net.1} parent=1 // pred_check
      _
    $region35: #{super_resolution_net.1} parent=1 // pred_check_branch
      %3081 = sbr.rel (0) target = $region37
    $region36: #{super_resolution_net.1} parent=1 // pred_region
      %s3083 = ssub.s32 256, 256
      %3084 = vsyncadd [#allocation4], %s3083
      %s3086 = sshll.u32 [#allocation8], 4
      %s3087 = int_to_ptr.vmem [resolvable:$true] %s3086
      %3089 = dma.vmem_to_hbm [thread:$0]  %s3087, 256, %s5, [#allocation4]
    $region37: #{super_resolution_net.1} parent=1 // pred_fallthru
      _
    // Predicated region
    $region38: #{super_resolution_net.1} parent=1 // pred_check
      _
    $region39: #{super_resolution_net.1} parent=1 // pred_check_branch
      %3091 = sbr.rel (0) target = $region41
    $region40: #{super_resolution_net.1} parent=1 // pred_region
      %3092 = dma.done [#allocation4], 256
    $region41: #{super_resolution_net.1} parent=1 // pred_fallthru
      _
    %3093 = vsyncpa [#allocation3], 1
    %3094 = vsyncpa [#allocation6], 1
    %3095 = vsyncpa [#allocation4], 1

</llo_original>
